<compile_context>
chip_gen: v6e
topology: v6e:2x2x1
jax: 0.10.0
libtpu: 0.0.40
codegen_flags: <defaults>
</compile_context>

<pallas_src>
import functools

import jax
import jax.numpy as jnp
import numpy as np
from jax import lax
from jax.experimental import pallas as pl
from jax.experimental.pallas import tpu as pltpu


def _lstm_seq_kernel(seq_len, hidden_size, num_layers, x0p_ref, whh0_ref, *args):
    """Runs the full T-step recurrence in one kernel invocation (grid=(1,)).

    x0p_ref : [T, B, 4H] f32   precomputed layer-0 input projection (+ bias)
    whh0_ref: [H, 4H]    bf16  layer-0 recurrent weight
    args    : for each layer l >= 1: (W_l [2H, 4H] bf16, b_l [1, 4H] f32); then out_ref.
    """
    H = hidden_size
    B = x0p_ref.shape[1]

    n_rest = 2 * (num_layers - 1)
    rest = args[:n_rest]
    out_ref = args[n_rest]

    # Hoist all weight loads out of the time loop.
    whh0 = whh0_ref[...]                                       # [H, 4H] bf16
    ws = [rest[2 * i][...] for i in range(num_layers - 1)]     # [2H, 4H] bf16
    bs = [rest[2 * i + 1][...] for i in range(num_layers - 1)] # [1, 4H]  f32

    def cell(gates, c_prev):
        # gate order i, f, g, o (PyTorch convention); elementwise kept in f32.
        i_g = jax.nn.sigmoid(gates[:, 0:H])
        f_g = jax.nn.sigmoid(gates[:, H:2 * H])
        g_g = jnp.tanh(gates[:, 2 * H:3 * H])
        o_g = jax.nn.sigmoid(gates[:, 3 * H:4 * H])
        c_new = f_g * c_prev + i_g * g_g
        h_new = o_g * jnp.tanh(c_new)
        return h_new, c_new

    def step(t, carry):
        hs, cs = carry  # tuples of [B, H] f32, one per layer
        new_hs = []
        new_cs = []

        # Layer 0: input projection already done; only the recurrent matmul is serial.
        gates0 = x0p_ref[t] + jnp.dot(
            hs[0].astype(jnp.bfloat16), whh0, preferred_element_type=jnp.float32)
        h0, c0 = cell(gates0, cs[0])
        new_hs.append(h0)
        new_cs.append(c0)
        x = h0

        # Layers >= 1: single fused [x | h_prev] @ [W_ih ; W_hh] matmul per layer.
        for l in range(1, num_layers):
            xh = jnp.concatenate([x, hs[l]], axis=-1).astype(jnp.bfloat16)  # [B, 2H]
            gates = jnp.dot(xh, ws[l - 1],
                            preferred_element_type=jnp.float32) + bs[l - 1]
            h_l, c_l = cell(gates, cs[l])
            new_hs.append(h_l)
            new_cs.append(c_l)
            x = h_l

        out_ref[t] = x  # top-layer hidden for timestep t (stays in VMEM until writeback)
        return tuple(new_hs), tuple(new_cs)

    zeros = tuple(jnp.zeros((B, H), jnp.float32) for _ in range(num_layers))
    lax.fori_loop(0, seq_len, step, (zeros, zeros), unroll=True)


def lstm_pallas(x, layer_params, hidden_size, num_layers):
    """x: [T, B, E] float32. layer_params: list of (W_ih [in,4H] bf16, W_hh [H,4H] bf16, b [1,4H] f32)."""
    T, B, E = x.shape
    H = hidden_size

    # Hoist the time-independent layer-0 input projection out of the serial recurrence:
    # one MXU-efficient [(T*B), E] x [E, 4H] matmul instead of T tiny ones.
    wih0, whh0_bf16, b0 = layer_params[0]
    x0p = jnp.dot(x.reshape(T * B, E).astype(jnp.bfloat16), wih0,
                  preferred_element_type=jnp.float32) + b0
    x0p = x0p.reshape(T, B, 4 * H)

    inputs = [x0p, whh0_bf16]
    in_specs = [
        pl.BlockSpec((T, B, 4 * H), lambda i: (0, 0, 0)),
        pl.BlockSpec((H, 4 * H), lambda i: (0, 0)),
    ]
    for l in range(1, num_layers):
        wih, whh, b = layer_params[l]
        w_stack = jnp.concatenate([wih, whh], axis=0)  # [2H, 4H] bf16
        inputs += [w_stack, b]
        in_specs += [
            pl.BlockSpec((2 * H, 4 * H), lambda i: (0, 0)),
            pl.BlockSpec((1, 4 * H), lambda i: (0, 0)),
        ]

    grid_spec = pltpu.PrefetchScalarGridSpec(
        num_scalar_prefetch=0,
        grid=(1,),  # whole sequence handled inside the kernel (time-blocked)
        in_specs=in_specs,
        out_specs=pl.BlockSpec((T, B, H), lambda i: (0, 0, 0)),
    )

    kernel = functools.partial(_lstm_seq_kernel, T, H, num_layers)
    return pl.pallas_call(
        kernel,
        out_shape=jax.ShapeDtypeStruct((T, B, H), jnp.float32),
        grid_spec=grid_spec,
        compiler_params=pltpu.CompilerParams(
            dimension_semantics=("arbitrary",),   # sequential carry over time
            vmem_limit_bytes=32 * 1024 * 1024,    # fits all generations incl. v7x (64 MiB)
        ),
    )(*inputs)


def init_decoder_params(key, vocab_size, embed_size, hidden_size, num_layers):
    """Synthetic init matching PyTorch stats (uniform +-1/sqrt(H)), fused-gate layout.

    Weights are stored gate-fused: W_ih [in_dim, 4H], W_hh [H, 4H], bias [1, 4H]
    with gate order i|f|g|o along the last dim. Weights are bf16, biases f32.
    """
    H = hidden_size
    keys = jax.random.split(key, 1 + 4 * num_layers)
    k = 1.0 / np.sqrt(H)
    embed = jax.random.normal(keys[0], (vocab_size, embed_size), jnp.float32) * 0.1

    layer_params = []
    for l in range(num_layers):
        in_dim = embed_size if l == 0 else H
        kw = keys[1 + 4 * l: 1 + 4 * (l + 1)]
        wih = jax.random.uniform(kw[0], (in_dim, 4 * H), jnp.float32, -k, k).astype(jnp.bfloat16)
        whh = jax.random.uniform(kw[1], (H, 4 * H), jnp.float32, -k, k).astype(jnp.bfloat16)
        b_ih = jax.random.uniform(kw[2], (1, 4 * H), jnp.float32, -k, k)
        b_hh = jax.random.uniform(kw[3], (1, 4 * H), jnp.float32, -k, k)
        layer_params.append((wih, whh, b_ih + b_hh))
    return embed, layer_params


def decoder_rnn_forward(features, captions, embed, layer_params, hidden_size, num_layers):
    """Pallas-backed equivalent of DecoderRNN.forward (eval mode)."""
    emb = jnp.take(embed, captions, axis=0)  # [T, B, E] embedding gather (plain-JAX glue)
    # TODO(synk): nn.Dropout(0.5) is identity in eval mode; training-mode RNG dropout not implemented.
    x = jnp.concatenate([features[None, :, :], emb], axis=0)  # [T+1, B, E]
    return lstm_pallas(x, layer_params, hidden_size, num_layers)  # [T+1, B, H]


def _lstm_reference(x, layer_params, hidden_size, num_layers):
    """Pure-JAX reference (same bf16-weight / f32-accumulate numerics) for verification."""
    T, B, _ = x.shape
    H = hidden_size
    hs = [jnp.zeros((B, H), jnp.float32) for _ in range(num_layers)]
    cs = [jnp.zeros((B, H), jnp.float32) for _ in range(num_layers)]
    outs = []
    for t in range(T):
        xt = x[t]
        for l in range(num_layers):
            wih, whh, b = layer_params[l]
            gates = (jnp.dot(xt.astype(jnp.bfloat16), wih, preferred_element_type=jnp.float32)
                     + jnp.dot(hs[l].astype(jnp.bfloat16), whh, preferred_element_type=jnp.float32)
                     + b)
            i_g = jax.nn.sigmoid(gates[:, 0:H])
            f_g = jax.nn.sigmoid(gates[:, H:2 * H])
            g_g = jnp.tanh(gates[:, 2 * H:3 * H])
            o_g = jax.nn.sigmoid(gates[:, 3 * H:4 * H])
            cs[l] = f_g * cs[l] + i_g * g_g
            hs[l] = o_g * jnp.tanh(cs[l])
            xt = hs[l]
        outs.append(xt)
    return jnp.stack(outs, axis=0)


if __name__ == "__main__":
    vocab_size = 50
    embed_size = 16
    hidden_size = 32
    num_layers = 2
    seq_len = 8
    batch = 2

    key = jax.random.PRNGKey(0)
    k_feat, k_cap, k_params = jax.random.split(key, 3)

    features = jax.random.normal(k_feat, (batch, embed_size), jnp.float32)           # [B, E]
    captions = jax.random.randint(k_cap, (seq_len, batch), 0, vocab_size, jnp.int32)  # [T, B]

    embed, layer_params = init_decoder_params(
        k_params, vocab_size, embed_size, hidden_size, num_layers)

    out = decoder_rnn_forward(features, captions, embed, layer_params,
                              hidden_size, num_layers)
    out = jax.block_until_ready(out)
    assert out.shape == (seq_len + 1, batch, hidden_size), out.shape

    # Cross-check against a pure-JAX reference with matching numerics.
    emb = jnp.take(embed, captions, axis=0)
    x_full = jnp.concatenate([features[None], emb], axis=0)
    ref = _lstm_reference(x_full, layer_params, hidden_size, num_layers)
    np.testing.assert_allclose(np.asarray(out), np.asarray(ref), rtol=1e-3, atol=1e-3)

    print("KERNEL_OK")
</pallas_src>

<mosaic_0001>
module attributes {stable_mosaic.version = 11 : i64} {
  func.func @_lstm_seq_kernel(%arg0: i32, %arg1: memref<9x2x128xf32, #tpu.memory_space<vmem>>, %arg2: memref<32x128xbf16, #tpu.memory_space<vmem>>, %arg3: memref<64x128xbf16, #tpu.memory_space<vmem>>, %arg4: memref<1x128xf32, #tpu.memory_space<vmem>>, %arg5: memref<9x2x32xf32, #tpu.memory_space<vmem>>) attributes {dimension_semantics = [#tpu.dimension_semantics<arbitrary>], iteration_bounds = array<i64: 1>, scalar_prefetch = 0 : i64, scratch_operands = 0 : i64, tpu.core_type = #tpu.core_type<tc>, window_params = [{pipeline_mode = #tpu.pipeline_mode<synchronous>, transform_indices = @transform_0, window_bounds = array<i64: 9, 2, 128>}, {pipeline_mode = #tpu.pipeline_mode<synchronous>, transform_indices = @transform_1, window_bounds = array<i64: 32, 128>}, {pipeline_mode = #tpu.pipeline_mode<synchronous>, transform_indices = @transform_2, window_bounds = array<i64: 64, 128>}, {pipeline_mode = #tpu.pipeline_mode<synchronous>, transform_indices = @transform_3, window_bounds = array<i64: 1, 128>}, {pipeline_mode = #tpu.pipeline_mode<synchronous>, transform_indices = @transform_4, window_bounds = array<i64: 9, 2, 32>}]} {
    %c0 = arith.constant 0 : index
    %c0_0 = arith.constant 0 : index
    %0 = vector.load %arg2[%c0, %c0_0] : memref<32x128xbf16, #tpu.memory_space<vmem>>, vector<32x128xbf16>
    %c0_1 = arith.constant 0 : index
    %c0_2 = arith.constant 0 : index
    %1 = vector.load %arg3[%c0_1, %c0_2] : memref<64x128xbf16, #tpu.memory_space<vmem>>, vector<64x128xbf16>
    %c0_3 = arith.constant 0 : index
    %c0_4 = arith.constant 0 : index
    %2 = vector.load %arg4[%c0_3, %c0_4] : memref<1x128xf32, #tpu.memory_space<vmem>>, vector<1x128xf32>
    %cst = arith.constant 0.000000e+00 : f32
    %3 = vector.broadcast %cst : f32 to vector<2x32xf32>
    %cst_5 = arith.constant 0.000000e+00 : f32
    %4 = vector.broadcast %cst_5 : f32 to vector<2x32xf32>
    %c0_i32 = arith.constant 0 : i32
    %5 = arith.index_cast %c0_i32 : i32 to index
    %c0_6 = arith.constant 0 : index
    %c0_7 = arith.constant 0 : index
    %6 = vector.load %arg1[%5, %c0_6, %c0_7] : memref<9x2x128xf32, #tpu.memory_space<vmem>>, vector<1x2x128xf32>
    %7 = vector.shape_cast %6 : vector<1x2x128xf32> to vector<2x128xf32>
    %8 = arith.truncf %3 : vector<2x32xf32> to vector<2x32xbf16>
    %cst_8 = arith.constant dense<0.000000e+00> : vector<2x128xf32>
    %9 = tpu.matmul %8, %0, %cst_8 {dimension_numbers = #tpu.dot_dimension_numbers<[1], [0], [0], [1], [0, 0, 1, 1], [], []>} : vector<2x32xbf16>, vector<32x128xbf16>, vector<2x128xf32> -> vector<2x128xf32>
    %10 = arith.addf %7, %9 : vector<2x128xf32>
    %11 = vector.extract_strided_slice %10 {offsets = [0, 0], sizes = [2, 32], strides = [1, 1]} : vector<2x128xf32> to vector<2x32xf32>
    %12 = arith.negf %11 : vector<2x32xf32>
    %13 = math.exp %12 : vector<2x32xf32>
    %cst_9 = arith.constant 1.000000e+00 : f32
    %14 = vector.broadcast %cst_9 : f32 to vector<2x32xf32>
    %15 = arith.addf %14, %13 : vector<2x32xf32>
    %16 = arith.divf %14, %15 : vector<2x32xf32>
    %17 = vector.extract_strided_slice %10 {offsets = [0, 32], sizes = [2, 32], strides = [1, 1]} : vector<2x128xf32> to vector<2x32xf32>
    %18 = arith.negf %17 : vector<2x32xf32>
    %19 = math.exp %18 : vector<2x32xf32>
    %cst_10 = arith.constant 1.000000e+00 : f32
    %20 = vector.broadcast %cst_10 : f32 to vector<2x32xf32>
    %21 = arith.addf %20, %19 : vector<2x32xf32>
    %22 = arith.divf %20, %21 : vector<2x32xf32>
    %23 = vector.extract_strided_slice %10 {offsets = [0, 64], sizes = [2, 32], strides = [1, 1]} : vector<2x128xf32> to vector<2x32xf32>
    %24 = math.tanh %23 : vector<2x32xf32>
    %25 = vector.extract_strided_slice %10 {offsets = [0, 96], sizes = [2, 32], strides = [1, 1]} : vector<2x128xf32> to vector<2x32xf32>
    %26 = arith.negf %25 : vector<2x32xf32>
    %27 = math.exp %26 : vector<2x32xf32>
    %cst_11 = arith.constant 1.000000e+00 : f32
    %28 = vector.broadcast %cst_11 : f32 to vector<2x32xf32>
    %29 = arith.addf %28, %27 : vector<2x32xf32>
    %30 = arith.divf %28, %29 : vector<2x32xf32>
    %31 = arith.mulf %22, %3 : vector<2x32xf32>
    %32 = arith.mulf %16, %24 : vector<2x32xf32>
    %33 = arith.addf %31, %32 : vector<2x32xf32>
    %34 = math.tanh %33 : vector<2x32xf32>
    %35 = arith.mulf %30, %34 : vector<2x32xf32>
    %36 = tpu.concatenate %35, %4 in 1 : vector<2x32xf32>, vector<2x32xf32> -> vector<2x64xf32>
    %37 = arith.truncf %36 : vector<2x64xf32> to vector<2x64xbf16>
    %cst_12 = arith.constant dense<0.000000e+00> : vector<2x128xf32>
    %38 = tpu.matmul %37, %1, %cst_12 {dimension_numbers = #tpu.dot_dimension_numbers<[1], [0], [0], [1], [0, 0, 1, 1], [], []>} : vector<2x64xbf16>, vector<64x128xbf16>, vector<2x128xf32> -> vector<2x128xf32>
    %39 = vector.broadcast %2 : vector<1x128xf32> to vector<2x128xf32>
    %40 = arith.addf %38, %39 : vector<2x128xf32>
    %41 = vector.extract_strided_slice %40 {offsets = [0, 0], sizes = [2, 32], strides = [1, 1]} : vector<2x128xf32> to vector<2x32xf32>
    %42 = arith.negf %41 : vector<2x32xf32>
    %43 = math.exp %42 : vector<2x32xf32>
    %cst_13 = arith.constant 1.000000e+00 : f32
    %44 = vector.broadcast %cst_13 : f32 to vector<2x32xf32>
    %45 = arith.addf %44, %43 : vector<2x32xf32>
    %46 = arith.divf %44, %45 : vector<2x32xf32>
    %47 = vector.extract_strided_slice %40 {offsets = [0, 32], sizes = [2, 32], strides = [1, 1]} : vector<2x128xf32> to vector<2x32xf32>
    %48 = arith.negf %47 : vector<2x32xf32>
    %49 = math.exp %48 : vector<2x32xf32>
    %cst_14 = arith.constant 1.000000e+00 : f32
    %50 = vector.broadcast %cst_14 : f32 to vector<2x32xf32>
    %51 = arith.addf %50, %49 : vector<2x32xf32>
    %52 = arith.divf %50, %51 : vector<2x32xf32>
    %53 = vector.extract_strided_slice %40 {offsets = [0, 64], sizes = [2, 32], strides = [1, 1]} : vector<2x128xf32> to vector<2x32xf32>
    %54 = math.tanh %53 : vector<2x32xf32>
    %55 = vector.extract_strided_slice %40 {offsets = [0, 96], sizes = [2, 32], strides = [1, 1]} : vector<2x128xf32> to vector<2x32xf32>
    %56 = arith.negf %55 : vector<2x32xf32>
    %57 = math.exp %56 : vector<2x32xf32>
    %cst_15 = arith.constant 1.000000e+00 : f32
    %58 = vector.broadcast %cst_15 : f32 to vector<2x32xf32>
    %59 = arith.addf %58, %57 : vector<2x32xf32>
    %60 = arith.divf %58, %59 : vector<2x32xf32>
    %61 = arith.mulf %52, %4 : vector<2x32xf32>
    %62 = arith.mulf %46, %54 : vector<2x32xf32>
    %63 = arith.addf %61, %62 : vector<2x32xf32>
    %64 = math.tanh %63 : vector<2x32xf32>
    %65 = arith.mulf %60, %64 : vector<2x32xf32>
    %66 = arith.index_cast %c0_i32 : i32 to index
    %c0_16 = arith.constant 0 : index
    %c0_17 = arith.constant 0 : index
    %67 = vector.load %arg5[%66, %c0_16, %c0_17] : memref<9x2x32xf32, #tpu.memory_space<vmem>>, vector<1x2x32xf32>
    %68 = vector.shape_cast %67 : vector<1x2x32xf32> to vector<2x32xf32>
    %69 = vector.shape_cast %65 : vector<2x32xf32> to vector<1x2x32xf32>
    tpu.vector_store %arg5[%66, %c0_16, %c0_17], %69 {strides = array<i32>} : memref<9x2x32xf32, #tpu.memory_space<vmem>>, vector<1x2x32xf32>,
    %c1_i32 = arith.constant 1 : i32
    %70 = arith.index_cast %c1_i32 : i32 to index
    %c0_18 = arith.constant 0 : index
    %c0_19 = arith.constant 0 : index
    %71 = vector.load %arg1[%70, %c0_18, %c0_19] : memref<9x2x128xf32, #tpu.memory_space<vmem>>, vector<1x2x128xf32>
    %72 = vector.shape_cast %71 : vector<1x2x128xf32> to vector<2x128xf32>
    %73 = arith.truncf %35 : vector<2x32xf32> to vector<2x32xbf16>
    %cst_20 = arith.constant dense<0.000000e+00> : vector<2x128xf32>
    %74 = tpu.matmul %73, %0, %cst_20 {dimension_numbers = #tpu.dot_dimension_numbers<[1], [0], [0], [1], [0, 0, 1, 1], [], []>} : vector<2x32xbf16>, vector<32x128xbf16>, vector<2x128xf32> -> vector<2x128xf32>
    %75 = arith.addf %72, %74 : vector<2x128xf32>
    %76 = vector.extract_strided_slice %75 {offsets = [0, 0], sizes = [2, 32], strides = [1, 1]} : vector<2x128xf32> to vector<2x32xf32>
    %77 = arith.negf %76 : vector<2x32xf32>
    %78 = math.exp %77 : vector<2x32xf32>
    %cst_21 = arith.constant 1.000000e+00 : f32
    %79 = vector.broadcast %cst_21 : f32 to vector<2x32xf32>
    %80 = arith.addf %79, %78 : vector<2x32xf32>
    %81 = arith.divf %79, %80 : vector<2x32xf32>
    %82 = vector.extract_strided_slice %75 {offsets = [0, 32], sizes = [2, 32], strides = [1, 1]} : vector<2x128xf32> to vector<2x32xf32>
    %83 = arith.negf %82 : vector<2x32xf32>
    %84 = math.exp %83 : vector<2x32xf32>
    %cst_22 = arith.constant 1.000000e+00 : f32
    %85 = vector.broadcast %cst_22 : f32 to vector<2x32xf32>
    %86 = arith.addf %85, %84 : vector<2x32xf32>
    %87 = arith.divf %85, %86 : vector<2x32xf32>
    %88 = vector.extract_strided_slice %75 {offsets = [0, 64], sizes = [2, 32], strides = [1, 1]} : vector<2x128xf32> to vector<2x32xf32>
    %89 = math.tanh %88 : vector<2x32xf32>
    %90 = vector.extract_strided_slice %75 {offsets = [0, 96], sizes = [2, 32], strides = [1, 1]} : vector<2x128xf32> to vector<2x32xf32>
    %91 = arith.negf %90 : vector<2x32xf32>
    %92 = math.exp %91 : vector<2x32xf32>
    %cst_23 = arith.constant 1.000000e+00 : f32
    %93 = vector.broadcast %cst_23 : f32 to vector<2x32xf32>
    %94 = arith.addf %93, %92 : vector<2x32xf32>
    %95 = arith.divf %93, %94 : vector<2x32xf32>
    %96 = arith.mulf %87, %33 : vector<2x32xf32>
    %97 = arith.mulf %81, %89 : vector<2x32xf32>
    %98 = arith.addf %96, %97 : vector<2x32xf32>
    %99 = math.tanh %98 : vector<2x32xf32>
    %100 = arith.mulf %95, %99 : vector<2x32xf32>
    %101 = tpu.concatenate %100, %65 in 1 : vector<2x32xf32>, vector<2x32xf32> -> vector<2x64xf32>
    %102 = arith.truncf %101 : vector<2x64xf32> to vector<2x64xbf16>
    %cst_24 = arith.constant dense<0.000000e+00> : vector<2x128xf32>
    %103 = tpu.matmul %102, %1, %cst_24 {dimension_numbers = #tpu.dot_dimension_numbers<[1], [0], [0], [1], [0, 0, 1, 1], [], []>} : vector<2x64xbf16>, vector<64x128xbf16>, vector<2x128xf32> -> vector<2x128xf32>
    %104 = vector.broadcast %2 : vector<1x128xf32> to vector<2x128xf32>
    %105 = arith.addf %103, %104 : vector<2x128xf32>
    %106 = vector.extract_strided_slice %105 {offsets = [0, 0], sizes = [2, 32], strides = [1, 1]} : vector<2x128xf32> to vector<2x32xf32>
    %107 = arith.negf %106 : vector<2x32xf32>
    %108 = math.exp %107 : vector<2x32xf32>
    %cst_25 = arith.constant 1.000000e+00 : f32
    %109 = vector.broadcast %cst_25 : f32 to vector<2x32xf32>
    %110 = arith.addf %109, %108 : vector<2x32xf32>
    %111 = arith.divf %109, %110 : vector<2x32xf32>
    %112 = vector.extract_strided_slice %105 {offsets = [0, 32], sizes = [2, 32], strides = [1, 1]} : vector<2x128xf32> to vector<2x32xf32>
    %113 = arith.negf %112 : vector<2x32xf32>
    %114 = math.exp %113 : vector<2x32xf32>
    %cst_26 = arith.constant 1.000000e+00 : f32
    %115 = vector.broadcast %cst_26 : f32 to vector<2x32xf32>
    %116 = arith.addf %115, %114 : vector<2x32xf32>
    %117 = arith.divf %115, %116 : vector<2x32xf32>
    %118 = vector.extract_strided_slice %105 {offsets = [0, 64], sizes = [2, 32], strides = [1, 1]} : vector<2x128xf32> to vector<2x32xf32>
    %119 = math.tanh %118 : vector<2x32xf32>
    %120 = vector.extract_strided_slice %105 {offsets = [0, 96], sizes = [2, 32], strides = [1, 1]} : vector<2x128xf32> to vector<2x32xf32>
    %121 = arith.negf %120 : vector<2x32xf32>
    %122 = math.exp %121 : vector<2x32xf32>
    %cst_27 = arith.constant 1.000000e+00 : f32
    %123 = vector.broadcast %cst_27 : f32 to vector<2x32xf32>
    %124 = arith.addf %123, %122 : vector<2x32xf32>
    %125 = arith.divf %123, %124 : vector<2x32xf32>
    %126 = arith.mulf %117, %63 : vector<2x32xf32>
    %127 = arith.mulf %111, %119 : vector<2x32xf32>
    %128 = arith.addf %126, %127 : vector<2x32xf32>
    %129 = math.tanh %128 : vector<2x32xf32>
    %130 = arith.mulf %125, %129 : vector<2x32xf32>
    %131 = arith.index_cast %c1_i32 : i32 to index
    %c0_28 = arith.constant 0 : index
    %c0_29 = arith.constant 0 : index
    %132 = vector.load %arg5[%131, %c0_28, %c0_29] : memref<9x2x32xf32, #tpu.memory_space<vmem>>, vector<1x2x32xf32>
    %133 = vector.shape_cast %132 : vector<1x2x32xf32> to vector<2x32xf32>
    %134 = vector.shape_cast %130 : vector<2x32xf32> to vector<1x2x32xf32>
    tpu.vector_store %arg5[%131, %c0_28, %c0_29], %134 {strides = array<i32>} : memref<9x2x32xf32, #tpu.memory_space<vmem>>, vector<1x2x32xf32>,
    %c2_i32 = arith.constant 2 : i32
    %135 = arith.index_cast %c2_i32 : i32 to index
    %c0_30 = arith.constant 0 : index
    %c0_31 = arith.constant 0 : index
    %136 = vector.load %arg1[%135, %c0_30, %c0_31] : memref<9x2x128xf32, #tpu.memory_space<vmem>>, vector<1x2x128xf32>
    %137 = vector.shape_cast %136 : vector<1x2x128xf32> to vector<2x128xf32>
    %138 = arith.truncf %100 : vector<2x32xf32> to vector<2x32xbf16>
    %cst_32 = arith.constant dense<0.000000e+00> : vector<2x128xf32>
    %139 = tpu.matmul %138, %0, %cst_32 {dimension_numbers = #tpu.dot_dimension_numbers<[1], [0], [0], [1], [0, 0, 1, 1], [], []>} : vector<2x32xbf16>, vector<32x128xbf16>, vector<2x128xf32> -> vector<2x128xf32>
    %140 = arith.addf %137, %139 : vector<2x128xf32>
    %141 = vector.extract_strided_slice %140 {offsets = [0, 0], sizes = [2, 32], strides = [1, 1]} : vector<2x128xf32> to vector<2x32xf32>
    %142 = arith.negf %141 : vector<2x32xf32>
    %143 = math.exp %142 : vector<2x32xf32>
    %cst_33 = arith.constant 1.000000e+00 : f32
    %144 = vector.broadcast %cst_33 : f32 to vector<2x32xf32>
    %145 = arith.addf %144, %143 : vector<2x32xf32>
    %146 = arith.divf %144, %145 : vector<2x32xf32>
    %147 = vector.extract_strided_slice %140 {offsets = [0, 32], sizes = [2, 32], strides = [1, 1]} : vector<2x128xf32> to vector<2x32xf32>
    %148 = arith.negf %147 : vector<2x32xf32>
    %149 = math.exp %148 : vector<2x32xf32>
    %cst_34 = arith.constant 1.000000e+00 : f32
    %150 = vector.broadcast %cst_34 : f32 to vector<2x32xf32>
    %151 = arith.addf %150, %149 : vector<2x32xf32>
    %152 = arith.divf %150, %151 : vector<2x32xf32>
    %153 = vector.extract_strided_slice %140 {offsets = [0, 64], sizes = [2, 32], strides = [1, 1]} : vector<2x128xf32> to vector<2x32xf32>
    %154 = math.tanh %153 : vector<2x32xf32>
    %155 = vector.extract_strided_slice %140 {offsets = [0, 96], sizes = [2, 32], strides = [1, 1]} : vector<2x128xf32> to vector<2x32xf32>
    %156 = arith.negf %155 : vector<2x32xf32>
    %157 = math.exp %156 : vector<2x32xf32>
    %cst_35 = arith.constant 1.000000e+00 : f32
    %158 = vector.broadcast %cst_35 : f32 to vector<2x32xf32>
    %159 = arith.addf %158, %157 : vector<2x32xf32>
    %160 = arith.divf %158, %159 : vector<2x32xf32>
    %161 = arith.mulf %152, %98 : vector<2x32xf32>
    %162 = arith.mulf %146, %154 : vector<2x32xf32>
    %163 = arith.addf %161, %162 : vector<2x32xf32>
    %164 = math.tanh %163 : vector<2x32xf32>
    %165 = arith.mulf %160, %164 : vector<2x32xf32>
    %166 = tpu.concatenate %165, %130 in 1 : vector<2x32xf32>, vector<2x32xf32> -> vector<2x64xf32>
    %167 = arith.truncf %166 : vector<2x64xf32> to vector<2x64xbf16>
    %cst_36 = arith.constant dense<0.000000e+00> : vector<2x128xf32>
    %168 = tpu.matmul %167, %1, %cst_36 {dimension_numbers = #tpu.dot_dimension_numbers<[1], [0], [0], [1], [0, 0, 1, 1], [], []>} : vector<2x64xbf16>, vector<64x128xbf16>, vector<2x128xf32> -> vector<2x128xf32>
    %169 = vector.broadcast %2 : vector<1x128xf32> to vector<2x128xf32>
    %170 = arith.addf %168, %169 : vector<2x128xf32>
    %171 = vector.extract_strided_slice %170 {offsets = [0, 0], sizes = [2, 32], strides = [1, 1]} : vector<2x128xf32> to vector<2x32xf32>
    %172 = arith.negf %171 : vector<2x32xf32>
    %173 = math.exp %172 : vector<2x32xf32>
    %cst_37 = arith.constant 1.000000e+00 : f32
    %174 = vector.broadcast %cst_37 : f32 to vector<2x32xf32>
    %175 = arith.addf %174, %173 : vector<2x32xf32>
    %176 = arith.divf %174, %175 : vector<2x32xf32>
    %177 = vector.extract_strided_slice %170 {offsets = [0, 32], sizes = [2, 32], strides = [1, 1]} : vector<2x128xf32> to vector<2x32xf32>
    %178 = arith.negf %177 : vector<2x32xf32>
    %179 = math.exp %178 : vector<2x32xf32>
    %cst_38 = arith.constant 1.000000e+00 : f32
    %180 = vector.broadcast %cst_38 : f32 to vector<2x32xf32>
    %181 = arith.addf %180, %179 : vector<2x32xf32>
    %182 = arith.divf %180, %181 : vector<2x32xf32>
    %183 = vector.extract_strided_slice %170 {offsets = [0, 64], sizes = [2, 32], strides = [1, 1]} : vector<2x128xf32> to vector<2x32xf32>
    %184 = math.tanh %183 : vector<2x32xf32>
    %185 = vector.extract_strided_slice %170 {offsets = [0, 96], sizes = [2, 32], strides = [1, 1]} : vector<2x128xf32> to vector<2x32xf32>
    %186 = arith.negf %185 : vector<2x32xf32>
    %187 = math.exp %186 : vector<2x32xf32>
    %cst_39 = arith.constant 1.000000e+00 : f32
    %188 = vector.broadcast %cst_39 : f32 to vector<2x32xf32>
    %189 = arith.addf %188, %187 : vector<2x32xf32>
    %190 = arith.divf %188, %189 : vector<2x32xf32>
    %191 = arith.mulf %182, %128 : vector<2x32xf32>
    %192 = arith.mulf %176, %184 : vector<2x32xf32>
    %193 = arith.addf %191, %192 : vector<2x32xf32>
    %194 = math.tanh %193 : vector<2x32xf32>
    %195 = arith.mulf %190, %194 : vector<2x32xf32>
    %196 = arith.index_cast %c2_i32 : i32 to index
    %c0_40 = arith.constant 0 : index
    %c0_41 = arith.constant 0 : index
    %197 = vector.load %arg5[%196, %c0_40, %c0_41] : memref<9x2x32xf32, #tpu.memory_space<vmem>>, vector<1x2x32xf32>
    %198 = vector.shape_cast %197 : vector<1x2x32xf32> to vector<2x32xf32>
    %199 = vector.shape_cast %195 : vector<2x32xf32> to vector<1x2x32xf32>
    tpu.vector_store %arg5[%196, %c0_40, %c0_41], %199 {strides = array<i32>} : memref<9x2x32xf32, #tpu.memory_space<vmem>>, vector<1x2x32xf32>,
    %c3_i32 = arith.constant 3 : i32
    %200 = arith.index_cast %c3_i32 : i32 to index
    %c0_42 = arith.constant 0 : index
    %c0_43 = arith.constant 0 : index
    %201 = vector.load %arg1[%200, %c0_42, %c0_43] : memref<9x2x128xf32, #tpu.memory_space<vmem>>, vector<1x2x128xf32>
    %202 = vector.shape_cast %201 : vector<1x2x128xf32> to vector<2x128xf32>
    %203 = arith.truncf %165 : vector<2x32xf32> to vector<2x32xbf16>
    %cst_44 = arith.constant dense<0.000000e+00> : vector<2x128xf32>
    %204 = tpu.matmul %203, %0, %cst_44 {dimension_numbers = #tpu.dot_dimension_numbers<[1], [0], [0], [1], [0, 0, 1, 1], [], []>} : vector<2x32xbf16>, vector<32x128xbf16>, vector<2x128xf32> -> vector<2x128xf32>
    %205 = arith.addf %202, %204 : vector<2x128xf32>
    %206 = vector.extract_strided_slice %205 {offsets = [0, 0], sizes = [2, 32], strides = [1, 1]} : vector<2x128xf32> to vector<2x32xf32>
    %207 = arith.negf %206 : vector<2x32xf32>
    %208 = math.exp %207 : vector<2x32xf32>
    %cst_45 = arith.constant 1.000000e+00 : f32
    %209 = vector.broadcast %cst_45 : f32 to vector<2x32xf32>
    %210 = arith.addf %209, %208 : vector<2x32xf32>
    %211 = arith.divf %209, %210 : vector<2x32xf32>
    %212 = vector.extract_strided_slice %205 {offsets = [0, 32], sizes = [2, 32], strides = [1, 1]} : vector<2x128xf32> to vector<2x32xf32>
    %213 = arith.negf %212 : vector<2x32xf32>
    %214 = math.exp %213 : vector<2x32xf32>
    %cst_46 = arith.constant 1.000000e+00 : f32
    %215 = vector.broadcast %cst_46 : f32 to vector<2x32xf32>
    %216 = arith.addf %215, %214 : vector<2x32xf32>
    %217 = arith.divf %215, %216 : vector<2x32xf32>
    %218 = vector.extract_strided_slice %205 {offsets = [0, 64], sizes = [2, 32], strides = [1, 1]} : vector<2x128xf32> to vector<2x32xf32>
    %219 = math.tanh %218 : vector<2x32xf32>
    %220 = vector.extract_strided_slice %205 {offsets = [0, 96], sizes = [2, 32], strides = [1, 1]} : vector<2x128xf32> to vector<2x32xf32>
    %221 = arith.negf %220 : vector<2x32xf32>
    %222 = math.exp %221 : vector<2x32xf32>
    %cst_47 = arith.constant 1.000000e+00 : f32
    %223 = vector.broadcast %cst_47 : f32 to vector<2x32xf32>
    %224 = arith.addf %223, %222 : vector<2x32xf32>
    %225 = arith.divf %223, %224 : vector<2x32xf32>
    %226 = arith.mulf %217, %163 : vector<2x32xf32>
    %227 = arith.mulf %211, %219 : vector<2x32xf32>
    %228 = arith.addf %226, %227 : vector<2x32xf32>
    %229 = math.tanh %228 : vector<2x32xf32>
    %230 = arith.mulf %225, %229 : vector<2x32xf32>
    %231 = tpu.concatenate %230, %195 in 1 : vector<2x32xf32>, vector<2x32xf32> -> vector<2x64xf32>
    %232 = arith.truncf %231 : vector<2x64xf32> to vector<2x64xbf16>
    %cst_48 = arith.constant dense<0.000000e+00> : vector<2x128xf32>
    %233 = tpu.matmul %232, %1, %cst_48 {dimension_numbers = #tpu.dot_dimension_numbers<[1], [0], [0], [1], [0, 0, 1, 1], [], []>} : vector<2x64xbf16>, vector<64x128xbf16>, vector<2x128xf32> -> vector<2x128xf32>
    %234 = vector.broadcast %2 : vector<1x128xf32> to vector<2x128xf32>
    %235 = arith.addf %233, %234 : vector<2x128xf32>
    %236 = vector.extract_strided_slice %235 {offsets = [0, 0], sizes = [2, 32], strides = [1, 1]} : vector<2x128xf32> to vector<2x32xf32>
    %237 = arith.negf %236 : vector<2x32xf32>
    %238 = math.exp %237 : vector<2x32xf32>
    %cst_49 = arith.constant 1.000000e+00 : f32
    %239 = vector.broadcast %cst_49 : f32 to vector<2x32xf32>
    %240 = arith.addf %239, %238 : vector<2x32xf32>
    %241 = arith.divf %239, %240 : vector<2x32xf32>
    %242 = vector.extract_strided_slice %235 {offsets = [0, 32], sizes = [2, 32], strides = [1, 1]} : vector<2x128xf32> to vector<2x32xf32>
    %243 = arith.negf %242 : vector<2x32xf32>
    %244 = math.exp %243 : vector<2x32xf32>
    %cst_50 = arith.constant 1.000000e+00 : f32
    %245 = vector.broadcast %cst_50 : f32 to vector<2x32xf32>
    %246 = arith.addf %245, %244 : vector<2x32xf32>
    %247 = arith.divf %245, %246 : vector<2x32xf32>
    %248 = vector.extract_strided_slice %235 {offsets = [0, 64], sizes = [2, 32], strides = [1, 1]} : vector<2x128xf32> to vector<2x32xf32>
    %249 = math.tanh %248 : vector<2x32xf32>
    %250 = vector.extract_strided_slice %235 {offsets = [0, 96], sizes = [2, 32], strides = [1, 1]} : vector<2x128xf32> to vector<2x32xf32>
    %251 = arith.negf %250 : vector<2x32xf32>
    %252 = math.exp %251 : vector<2x32xf32>
    %cst_51 = arith.constant 1.000000e+00 : f32
    %253 = vector.broadcast %cst_51 : f32 to vector<2x32xf32>
    %254 = arith.addf %253, %252 : vector<2x32xf32>
    %255 = arith.divf %253, %254 : vector<2x32xf32>
    %256 = arith.mulf %247, %193 : vector<2x32xf32>
    %257 = arith.mulf %241, %249 : vector<2x32xf32>
    %258 = arith.addf %256, %257 : vector<2x32xf32>
    %259 = math.tanh %258 : vector<2x32xf32>
    %260 = arith.mulf %255, %259 : vector<2x32xf32>
    %261 = arith.index_cast %c3_i32 : i32 to index
    %c0_52 = arith.constant 0 : index
    %c0_53 = arith.constant 0 : index
    %262 = vector.load %arg5[%261, %c0_52, %c0_53] : memref<9x2x32xf32, #tpu.memory_space<vmem>>, vector<1x2x32xf32>
    %263 = vector.shape_cast %262 : vector<1x2x32xf32> to vector<2x32xf32>
    %264 = vector.shape_cast %260 : vector<2x32xf32> to vector<1x2x32xf32>
    tpu.vector_store %arg5[%261, %c0_52, %c0_53], %264 {strides = array<i32>} : memref<9x2x32xf32, #tpu.memory_space<vmem>>, vector<1x2x32xf32>,
    %c4_i32 = arith.constant 4 : i32
    %265 = arith.index_cast %c4_i32 : i32 to index
    %c0_54 = arith.constant 0 : index
    %c0_55 = arith.constant 0 : index
    %266 = vector.load %arg1[%265, %c0_54, %c0_55] : memref<9x2x128xf32, #tpu.memory_space<vmem>>, vector<1x2x128xf32>
    %267 = vector.shape_cast %266 : vector<1x2x128xf32> to vector<2x128xf32>
    %268 = arith.truncf %230 : vector<2x32xf32> to vector<2x32xbf16>
    %cst_56 = arith.constant dense<0.000000e+00> : vector<2x128xf32>
    %269 = tpu.matmul %268, %0, %cst_56 {dimension_numbers = #tpu.dot_dimension_numbers<[1], [0], [0], [1], [0, 0, 1, 1], [], []>} : vector<2x32xbf16>, vector<32x128xbf16>, vector<2x128xf32> -> vector<2x128xf32>
    %270 = arith.addf %267, %269 : vector<2x128xf32>
    %271 = vector.extract_strided_slice %270 {offsets = [0, 0], sizes = [2, 32], strides = [1, 1]} : vector<2x128xf32> to vector<2x32xf32>
    %272 = arith.negf %271 : vector<2x32xf32>
    %273 = math.exp %272 : vector<2x32xf32>
    %cst_57 = arith.constant 1.000000e+00 : f32
    %274 = vector.broadcast %cst_57 : f32 to vector<2x32xf32>
    %275 = arith.addf %274, %273 : vector<2x32xf32>
    %276 = arith.divf %274, %275 : vector<2x32xf32>
    %277 = vector.extract_strided_slice %270 {offsets = [0, 32], sizes = [2, 32], strides = [1, 1]} : vector<2x128xf32> to vector<2x32xf32>
    %278 = arith.negf %277 : vector<2x32xf32>
    %279 = math.exp %278 : vector<2x32xf32>
    %cst_58 = arith.constant 1.000000e+00 : f32
    %280 = vector.broadcast %cst_58 : f32 to vector<2x32xf32>
    %281 = arith.addf %280, %279 : vector<2x32xf32>
    %282 = arith.divf %280, %281 : vector<2x32xf32>
    %283 = vector.extract_strided_slice %270 {offsets = [0, 64], sizes = [2, 32], strides = [1, 1]} : vector<2x128xf32> to vector<2x32xf32>
    %284 = math.tanh %283 : vector<2x32xf32>
    %285 = vector.extract_strided_slice %270 {offsets = [0, 96], sizes = [2, 32], strides = [1, 1]} : vector<2x128xf32> to vector<2x32xf32>
    %286 = arith.negf %285 : vector<2x32xf32>
    %287 = math.exp %286 : vector<2x32xf32>
    %cst_59 = arith.constant 1.000000e+00 : f32
    %288 = vector.broadcast %cst_59 : f32 to vector<2x32xf32>
    %289 = arith.addf %288, %287 : vector<2x32xf32>
    %290 = arith.divf %288, %289 : vector<2x32xf32>
    %291 = arith.mulf %282, %228 : vector<2x32xf32>
    %292 = arith.mulf %276, %284 : vector<2x32xf32>
    %293 = arith.addf %291, %292 : vector<2x32xf32>
    %294 = math.tanh %293 : vector<2x32xf32>
    %295 = arith.mulf %290, %294 : vector<2x32xf32>
    %296 = tpu.concatenate %295, %260 in 1 : vector<2x32xf32>, vector<2x32xf32> -> vector<2x64xf32>
    %297 = arith.truncf %296 : vector<2x64xf32> to vector<2x64xbf16>
    %cst_60 = arith.constant dense<0.000000e+00> : vector<2x128xf32>
    %298 = tpu.matmul %297, %1, %cst_60 {dimension_numbers = #tpu.dot_dimension_numbers<[1], [0], [0], [1], [0, 0, 1, 1], [], []>} : vector<2x64xbf16>, vector<64x128xbf16>, vector<2x128xf32> -> vector<2x128xf32>
    %299 = vector.broadcast %2 : vector<1x128xf32> to vector<2x128xf32>
    %300 = arith.addf %298, %299 : vector<2x128xf32>
    %301 = vector.extract_strided_slice %300 {offsets = [0, 0], sizes = [2, 32], strides = [1, 1]} : vector<2x128xf32> to vector<2x32xf32>
    %302 = arith.negf %301 : vector<2x32xf32>
    %303 = math.exp %302 : vector<2x32xf32>
    %cst_61 = arith.constant 1.000000e+00 : f32
    %304 = vector.broadcast %cst_61 : f32 to vector<2x32xf32>
    %305 = arith.addf %304, %303 : vector<2x32xf32>
    %306 = arith.divf %304, %305 : vector<2x32xf32>
    %307 = vector.extract_strided_slice %300 {offsets = [0, 32], sizes = [2, 32], strides = [1, 1]} : vector<2x128xf32> to vector<2x32xf32>
    %308 = arith.negf %307 : vector<2x32xf32>
    %309 = math.exp %308 : vector<2x32xf32>
    %cst_62 = arith.constant 1.000000e+00 : f32
    %310 = vector.broadcast %cst_62 : f32 to vector<2x32xf32>
    %311 = arith.addf %310, %309 : vector<2x32xf32>
    %312 = arith.divf %310, %311 : vector<2x32xf32>
    %313 = vector.extract_strided_slice %300 {offsets = [0, 64], sizes = [2, 32], strides = [1, 1]} : vector<2x128xf32> to vector<2x32xf32>
    %314 = math.tanh %313 : vector<2x32xf32>
    %315 = vector.extract_strided_slice %300 {offsets = [0, 96], sizes = [2, 32], strides = [1, 1]} : vector<2x128xf32> to vector<2x32xf32>
    %316 = arith.negf %315 : vector<2x32xf32>
    %317 = math.exp %316 : vector<2x32xf32>
    %cst_63 = arith.constant 1.000000e+00 : f32
    %318 = vector.broadcast %cst_63 : f32 to vector<2x32xf32>
    %319 = arith.addf %318, %317 : vector<2x32xf32>
    %320 = arith.divf %318, %319 : vector<2x32xf32>
    %321 = arith.mulf %312, %258 : vector<2x32xf32>
    %322 = arith.mulf %306, %314 : vector<2x32xf32>
    %323 = arith.addf %321, %322 : vector<2x32xf32>
    %324 = math.tanh %323 : vector<2x32xf32>
    %325 = arith.mulf %320, %324 : vector<2x32xf32>
    %326 = arith.index_cast %c4_i32 : i32 to index
    %c0_64 = arith.constant 0 : index
    %c0_65 = arith.constant 0 : index
    %327 = vector.load %arg5[%326, %c0_64, %c0_65] : memref<9x2x32xf32, #tpu.memory_space<vmem>>, vector<1x2x32xf32>
    %328 = vector.shape_cast %327 : vector<1x2x32xf32> to vector<2x32xf32>
    %329 = vector.shape_cast %325 : vector<2x32xf32> to vector<1x2x32xf32>
    tpu.vector_store %arg5[%326, %c0_64, %c0_65], %329 {strides = array<i32>} : memref<9x2x32xf32, #tpu.memory_space<vmem>>, vector<1x2x32xf32>,
    %c5_i32 = arith.constant 5 : i32
    %330 = arith.index_cast %c5_i32 : i32 to index
    %c0_66 = arith.constant 0 : index
    %c0_67 = arith.constant 0 : index
    %331 = vector.load %arg1[%330, %c0_66, %c0_67] : memref<9x2x128xf32, #tpu.memory_space<vmem>>, vector<1x2x128xf32>
    %332 = vector.shape_cast %331 : vector<1x2x128xf32> to vector<2x128xf32>
    %333 = arith.truncf %295 : vector<2x32xf32> to vector<2x32xbf16>
    %cst_68 = arith.constant dense<0.000000e+00> : vector<2x128xf32>
    %334 = tpu.matmul %333, %0, %cst_68 {dimension_numbers = #tpu.dot_dimension_numbers<[1], [0], [0], [1], [0, 0, 1, 1], [], []>} : vector<2x32xbf16>, vector<32x128xbf16>, vector<2x128xf32> -> vector<2x128xf32>
    %335 = arith.addf %332, %334 : vector<2x128xf32>
    %336 = vector.extract_strided_slice %335 {offsets = [0, 0], sizes = [2, 32], strides = [1, 1]} : vector<2x128xf32> to vector<2x32xf32>
    %337 = arith.negf %336 : vector<2x32xf32>
    %338 = math.exp %337 : vector<2x32xf32>
    %cst_69 = arith.constant 1.000000e+00 : f32
    %339 = vector.broadcast %cst_69 : f32 to vector<2x32xf32>
    %340 = arith.addf %339, %338 : vector<2x32xf32>
    %341 = arith.divf %339, %340 : vector<2x32xf32>
    %342 = vector.extract_strided_slice %335 {offsets = [0, 32], sizes = [2, 32], strides = [1, 1]} : vector<2x128xf32> to vector<2x32xf32>
    %343 = arith.negf %342 : vector<2x32xf32>
    %344 = math.exp %343 : vector<2x32xf32>
    %cst_70 = arith.constant 1.000000e+00 : f32
    %345 = vector.broadcast %cst_70 : f32 to vector<2x32xf32>
    %346 = arith.addf %345, %344 : vector<2x32xf32>
    %347 = arith.divf %345, %346 : vector<2x32xf32>
    %348 = vector.extract_strided_slice %335 {offsets = [0, 64], sizes = [2, 32], strides = [1, 1]} : vector<2x128xf32> to vector<2x32xf32>
    %349 = math.tanh %348 : vector<2x32xf32>
    %350 = vector.extract_strided_slice %335 {offsets = [0, 96], sizes = [2, 32], strides = [1, 1]} : vector<2x128xf32> to vector<2x32xf32>
    %351 = arith.negf %350 : vector<2x32xf32>
    %352 = math.exp %351 : vector<2x32xf32>
    %cst_71 = arith.constant 1.000000e+00 : f32
    %353 = vector.broadcast %cst_71 : f32 to vector<2x32xf32>
    %354 = arith.addf %353, %352 : vector<2x32xf32>
    %355 = arith.divf %353, %354 : vector<2x32xf32>
    %356 = arith.mulf %347, %293 : vector<2x32xf32>
    %357 = arith.mulf %341, %349 : vector<2x32xf32>
    %358 = arith.addf %356, %357 : vector<2x32xf32>
    %359 = math.tanh %358 : vector<2x32xf32>
    %360 = arith.mulf %355, %359 : vector<2x32xf32>
    %361 = tpu.concatenate %360, %325 in 1 : vector<2x32xf32>, vector<2x32xf32> -> vector<2x64xf32>
    %362 = arith.truncf %361 : vector<2x64xf32> to vector<2x64xbf16>
    %cst_72 = arith.constant dense<0.000000e+00> : vector<2x128xf32>
    %363 = tpu.matmul %362, %1, %cst_72 {dimension_numbers = #tpu.dot_dimension_numbers<[1], [0], [0], [1], [0, 0, 1, 1], [], []>} : vector<2x64xbf16>, vector<64x128xbf16>, vector<2x128xf32> -> vector<2x128xf32>
    %364 = vector.broadcast %2 : vector<1x128xf32> to vector<2x128xf32>
    %365 = arith.addf %363, %364 : vector<2x128xf32>
    %366 = vector.extract_strided_slice %365 {offsets = [0, 0], sizes = [2, 32], strides = [1, 1]} : vector<2x128xf32> to vector<2x32xf32>
    %367 = arith.negf %366 : vector<2x32xf32>
    %368 = math.exp %367 : vector<2x32xf32>
    %cst_73 = arith.constant 1.000000e+00 : f32
    %369 = vector.broadcast %cst_73 : f32 to vector<2x32xf32>
    %370 = arith.addf %369, %368 : vector<2x32xf32>
    %371 = arith.divf %369, %370 : vector<2x32xf32>
    %372 = vector.extract_strided_slice %365 {offsets = [0, 32], sizes = [2, 32], strides = [1, 1]} : vector<2x128xf32> to vector<2x32xf32>
    %373 = arith.negf %372 : vector<2x32xf32>
    %374 = math.exp %373 : vector<2x32xf32>
    %cst_74 = arith.constant 1.000000e+00 : f32
    %375 = vector.broadcast %cst_74 : f32 to vector<2x32xf32>
    %376 = arith.addf %375, %374 : vector<2x32xf32>
    %377 = arith.divf %375, %376 : vector<2x32xf32>
    %378 = vector.extract_strided_slice %365 {offsets = [0, 64], sizes = [2, 32], strides = [1, 1]} : vector<2x128xf32> to vector<2x32xf32>
    %379 = math.tanh %378 : vector<2x32xf32>
    %380 = vector.extract_strided_slice %365 {offsets = [0, 96], sizes = [2, 32], strides = [1, 1]} : vector<2x128xf32> to vector<2x32xf32>
    %381 = arith.negf %380 : vector<2x32xf32>
    %382 = math.exp %381 : vector<2x32xf32>
    %cst_75 = arith.constant 1.000000e+00 : f32
    %383 = vector.broadcast %cst_75 : f32 to vector<2x32xf32>
    %384 = arith.addf %383, %382 : vector<2x32xf32>
    %385 = arith.divf %383, %384 : vector<2x32xf32>
    %386 = arith.mulf %377, %323 : vector<2x32xf32>
    %387 = arith.mulf %371, %379 : vector<2x32xf32>
    %388 = arith.addf %386, %387 : vector<2x32xf32>
    %389 = math.tanh %388 : vector<2x32xf32>
    %390 = arith.mulf %385, %389 : vector<2x32xf32>
    %391 = arith.index_cast %c5_i32 : i32 to index
    %c0_76 = arith.constant 0 : index
    %c0_77 = arith.constant 0 : index
    %392 = vector.load %arg5[%391, %c0_76, %c0_77] : memref<9x2x32xf32, #tpu.memory_space<vmem>>, vector<1x2x32xf32>
    %393 = vector.shape_cast %392 : vector<1x2x32xf32> to vector<2x32xf32>
    %394 = vector.shape_cast %390 : vector<2x32xf32> to vector<1x2x32xf32>
    tpu.vector_store %arg5[%391, %c0_76, %c0_77], %394 {strides = array<i32>} : memref<9x2x32xf32, #tpu.memory_space<vmem>>, vector<1x2x32xf32>,
    %c6_i32 = arith.constant 6 : i32
    %395 = arith.index_cast %c6_i32 : i32 to index
    %c0_78 = arith.constant 0 : index
    %c0_79 = arith.constant 0 : index
    %396 = vector.load %arg1[%395, %c0_78, %c0_79] : memref<9x2x128xf32, #tpu.memory_space<vmem>>, vector<1x2x128xf32>
    %397 = vector.shape_cast %396 : vector<1x2x128xf32> to vector<2x128xf32>
    %398 = arith.truncf %360 : vector<2x32xf32> to vector<2x32xbf16>
    %cst_80 = arith.constant dense<0.000000e+00> : vector<2x128xf32>
    %399 = tpu.matmul %398, %0, %cst_80 {dimension_numbers = #tpu.dot_dimension_numbers<[1], [0], [0], [1], [0, 0, 1, 1], [], []>} : vector<2x32xbf16>, vector<32x128xbf16>, vector<2x128xf32> -> vector<2x128xf32>
    %400 = arith.addf %397, %399 : vector<2x128xf32>
    %401 = vector.extract_strided_slice %400 {offsets = [0, 0], sizes = [2, 32], strides = [1, 1]} : vector<2x128xf32> to vector<2x32xf32>
    %402 = arith.negf %401 : vector<2x32xf32>
    %403 = math.exp %402 : vector<2x32xf32>
    %cst_81 = arith.constant 1.000000e+00 : f32
    %404 = vector.broadcast %cst_81 : f32 to vector<2x32xf32>
    %405 = arith.addf %404, %403 : vector<2x32xf32>
    %406 = arith.divf %404, %405 : vector<2x32xf32>
    %407 = vector.extract_strided_slice %400 {offsets = [0, 32], sizes = [2, 32], strides = [1, 1]} : vector<2x128xf32> to vector<2x32xf32>
    %408 = arith.negf %407 : vector<2x32xf32>
    %409 = math.exp %408 : vector<2x32xf32>
    %cst_82 = arith.constant 1.000000e+00 : f32
    %410 = vector.broadcast %cst_82 : f32 to vector<2x32xf32>
    %411 = arith.addf %410, %409 : vector<2x32xf32>
    %412 = arith.divf %410, %411 : vector<2x32xf32>
    %413 = vector.extract_strided_slice %400 {offsets = [0, 64], sizes = [2, 32], strides = [1, 1]} : vector<2x128xf32> to vector<2x32xf32>
    %414 = math.tanh %413 : vector<2x32xf32>
    %415 = vector.extract_strided_slice %400 {offsets = [0, 96], sizes = [2, 32], strides = [1, 1]} : vector<2x128xf32> to vector<2x32xf32>
    %416 = arith.negf %415 : vector<2x32xf32>
    %417 = math.exp %416 : vector<2x32xf32>
    %cst_83 = arith.constant 1.000000e+00 : f32
    %418 = vector.broadcast %cst_83 : f32 to vector<2x32xf32>
    %419 = arith.addf %418, %417 : vector<2x32xf32>
    %420 = arith.divf %418, %419 : vector<2x32xf32>
    %421 = arith.mulf %412, %358 : vector<2x32xf32>
    %422 = arith.mulf %406, %414 : vector<2x32xf32>
    %423 = arith.addf %421, %422 : vector<2x32xf32>
    %424 = math.tanh %423 : vector<2x32xf32>
    %425 = arith.mulf %420, %424 : vector<2x32xf32>
    %426 = tpu.concatenate %425, %390 in 1 : vector<2x32xf32>, vector<2x32xf32> -> vector<2x64xf32>
    %427 = arith.truncf %426 : vector<2x64xf32> to vector<2x64xbf16>
    %cst_84 = arith.constant dense<0.000000e+00> : vector<2x128xf32>
    %428 = tpu.matmul %427, %1, %cst_84 {dimension_numbers = #tpu.dot_dimension_numbers<[1], [0], [0], [1], [0, 0, 1, 1], [], []>} : vector<2x64xbf16>, vector<64x128xbf16>, vector<2x128xf32> -> vector<2x128xf32>
    %429 = vector.broadcast %2 : vector<1x128xf32> to vector<2x128xf32>
    %430 = arith.addf %428, %429 : vector<2x128xf32>
    %431 = vector.extract_strided_slice %430 {offsets = [0, 0], sizes = [2, 32], strides = [1, 1]} : vector<2x128xf32> to vector<2x32xf32>
    %432 = arith.negf %431 : vector<2x32xf32>
    %433 = math.exp %432 : vector<2x32xf32>
    %cst_85 = arith.constant 1.000000e+00 : f32
    %434 = vector.broadcast %cst_85 : f32 to vector<2x32xf32>
    %435 = arith.addf %434, %433 : vector<2x32xf32>
    %436 = arith.divf %434, %435 : vector<2x32xf32>
    %437 = vector.extract_strided_slice %430 {offsets = [0, 32], sizes = [2, 32], strides = [1, 1]} : vector<2x128xf32> to vector<2x32xf32>
    %438 = arith.negf %437 : vector<2x32xf32>
    %439 = math.exp %438 : vector<2x32xf32>
    %cst_86 = arith.constant 1.000000e+00 : f32
    %440 = vector.broadcast %cst_86 : f32 to vector<2x32xf32>
    %441 = arith.addf %440, %439 : vector<2x32xf32>
    %442 = arith.divf %440, %441 : vector<2x32xf32>
    %443 = vector.extract_strided_slice %430 {offsets = [0, 64], sizes = [2, 32], strides = [1, 1]} : vector<2x128xf32> to vector<2x32xf32>
    %444 = math.tanh %443 : vector<2x32xf32>
    %445 = vector.extract_strided_slice %430 {offsets = [0, 96], sizes = [2, 32], strides = [1, 1]} : vector<2x128xf32> to vector<2x32xf32>
    %446 = arith.negf %445 : vector<2x32xf32>
    %447 = math.exp %446 : vector<2x32xf32>
    %cst_87 = arith.constant 1.000000e+00 : f32
    %448 = vector.broadcast %cst_87 : f32 to vector<2x32xf32>
    %449 = arith.addf %448, %447 : vector<2x32xf32>
    %450 = arith.divf %448, %449 : vector<2x32xf32>
    %451 = arith.mulf %442, %388 : vector<2x32xf32>
    %452 = arith.mulf %436, %444 : vector<2x32xf32>
    %453 = arith.addf %451, %452 : vector<2x32xf32>
    %454 = math.tanh %453 : vector<2x32xf32>
    %455 = arith.mulf %450, %454 : vector<2x32xf32>
    %456 = arith.index_cast %c6_i32 : i32 to index
    %c0_88 = arith.constant 0 : index
    %c0_89 = arith.constant 0 : index
    %457 = vector.load %arg5[%456, %c0_88, %c0_89] : memref<9x2x32xf32, #tpu.memory_space<vmem>>, vector<1x2x32xf32>
    %458 = vector.shape_cast %457 : vector<1x2x32xf32> to vector<2x32xf32>
    %459 = vector.shape_cast %455 : vector<2x32xf32> to vector<1x2x32xf32>
    tpu.vector_store %arg5[%456, %c0_88, %c0_89], %459 {strides = array<i32>} : memref<9x2x32xf32, #tpu.memory_space<vmem>>, vector<1x2x32xf32>,
    %c7_i32 = arith.constant 7 : i32
    %460 = arith.index_cast %c7_i32 : i32 to index
    %c0_90 = arith.constant 0 : index
    %c0_91 = arith.constant 0 : index
    %461 = vector.load %arg1[%460, %c0_90, %c0_91] : memref<9x2x128xf32, #tpu.memory_space<vmem>>, vector<1x2x128xf32>
    %462 = vector.shape_cast %461 : vector<1x2x128xf32> to vector<2x128xf32>
    %463 = arith.truncf %425 : vector<2x32xf32> to vector<2x32xbf16>
    %cst_92 = arith.constant dense<0.000000e+00> : vector<2x128xf32>
    %464 = tpu.matmul %463, %0, %cst_92 {dimension_numbers = #tpu.dot_dimension_numbers<[1], [0], [0], [1], [0, 0, 1, 1], [], []>} : vector<2x32xbf16>, vector<32x128xbf16>, vector<2x128xf32> -> vector<2x128xf32>
    %465 = arith.addf %462, %464 : vector<2x128xf32>
    %466 = vector.extract_strided_slice %465 {offsets = [0, 0], sizes = [2, 32], strides = [1, 1]} : vector<2x128xf32> to vector<2x32xf32>
    %467 = arith.negf %466 : vector<2x32xf32>
    %468 = math.exp %467 : vector<2x32xf32>
    %cst_93 = arith.constant 1.000000e+00 : f32
    %469 = vector.broadcast %cst_93 : f32 to vector<2x32xf32>
    %470 = arith.addf %469, %468 : vector<2x32xf32>
    %471 = arith.divf %469, %470 : vector<2x32xf32>
    %472 = vector.extract_strided_slice %465 {offsets = [0, 32], sizes = [2, 32], strides = [1, 1]} : vector<2x128xf32> to vector<2x32xf32>
    %473 = arith.negf %472 : vector<2x32xf32>
    %474 = math.exp %473 : vector<2x32xf32>
    %cst_94 = arith.constant 1.000000e+00 : f32
    %475 = vector.broadcast %cst_94 : f32 to vector<2x32xf32>
    %476 = arith.addf %475, %474 : vector<2x32xf32>
    %477 = arith.divf %475, %476 : vector<2x32xf32>
    %478 = vector.extract_strided_slice %465 {offsets = [0, 64], sizes = [2, 32], strides = [1, 1]} : vector<2x128xf32> to vector<2x32xf32>
    %479 = math.tanh %478 : vector<2x32xf32>
    %480 = vector.extract_strided_slice %465 {offsets = [0, 96], sizes = [2, 32], strides = [1, 1]} : vector<2x128xf32> to vector<2x32xf32>
    %481 = arith.negf %480 : vector<2x32xf32>
    %482 = math.exp %481 : vector<2x32xf32>
    %cst_95 = arith.constant 1.000000e+00 : f32
    %483 = vector.broadcast %cst_95 : f32 to vector<2x32xf32>
    %484 = arith.addf %483, %482 : vector<2x32xf32>
    %485 = arith.divf %483, %484 : vector<2x32xf32>
    %486 = arith.mulf %477, %423 : vector<2x32xf32>
    %487 = arith.mulf %471, %479 : vector<2x32xf32>
    %488 = arith.addf %486, %487 : vector<2x32xf32>
    %489 = math.tanh %488 : vector<2x32xf32>
    %490 = arith.mulf %485, %489 : vector<2x32xf32>
    %491 = tpu.concatenate %490, %455 in 1 : vector<2x32xf32>, vector<2x32xf32> -> vector<2x64xf32>
    %492 = arith.truncf %491 : vector<2x64xf32> to vector<2x64xbf16>
    %cst_96 = arith.constant dense<0.000000e+00> : vector<2x128xf32>
    %493 = tpu.matmul %492, %1, %cst_96 {dimension_numbers = #tpu.dot_dimension_numbers<[1], [0], [0], [1], [0, 0, 1, 1], [], []>} : vector<2x64xbf16>, vector<64x128xbf16>, vector<2x128xf32> -> vector<2x128xf32>
    %494 = vector.broadcast %2 : vector<1x128xf32> to vector<2x128xf32>
    %495 = arith.addf %493, %494 : vector<2x128xf32>
    %496 = vector.extract_strided_slice %495 {offsets = [0, 0], sizes = [2, 32], strides = [1, 1]} : vector<2x128xf32> to vector<2x32xf32>
    %497 = arith.negf %496 : vector<2x32xf32>
    %498 = math.exp %497 : vector<2x32xf32>
    %cst_97 = arith.constant 1.000000e+00 : f32
    %499 = vector.broadcast %cst_97 : f32 to vector<2x32xf32>
    %500 = arith.addf %499, %498 : vector<2x32xf32>
    %501 = arith.divf %499, %500 : vector<2x32xf32>
    %502 = vector.extract_strided_slice %495 {offsets = [0, 32], sizes = [2, 32], strides = [1, 1]} : vector<2x128xf32> to vector<2x32xf32>
    %503 = arith.negf %502 : vector<2x32xf32>
    %504 = math.exp %503 : vector<2x32xf32>
    %cst_98 = arith.constant 1.000000e+00 : f32
    %505 = vector.broadcast %cst_98 : f32 to vector<2x32xf32>
    %506 = arith.addf %505, %504 : vector<2x32xf32>
    %507 = arith.divf %505, %506 : vector<2x32xf32>
    %508 = vector.extract_strided_slice %495 {offsets = [0, 64], sizes = [2, 32], strides = [1, 1]} : vector<2x128xf32> to vector<2x32xf32>
    %509 = math.tanh %508 : vector<2x32xf32>
    %510 = vector.extract_strided_slice %495 {offsets = [0, 96], sizes = [2, 32], strides = [1, 1]} : vector<2x128xf32> to vector<2x32xf32>
    %511 = arith.negf %510 : vector<2x32xf32>
    %512 = math.exp %511 : vector<2x32xf32>
    %cst_99 = arith.constant 1.000000e+00 : f32
    %513 = vector.broadcast %cst_99 : f32 to vector<2x32xf32>
    %514 = arith.addf %513, %512 : vector<2x32xf32>
    %515 = arith.divf %513, %514 : vector<2x32xf32>
    %516 = arith.mulf %507, %453 : vector<2x32xf32>
    %517 = arith.mulf %501, %509 : vector<2x32xf32>
    %518 = arith.addf %516, %517 : vector<2x32xf32>
    %519 = math.tanh %518 : vector<2x32xf32>
    %520 = arith.mulf %515, %519 : vector<2x32xf32>
    %521 = arith.index_cast %c7_i32 : i32 to index
    %c0_100 = arith.constant 0 : index
    %c0_101 = arith.constant 0 : index
    %522 = vector.load %arg5[%521, %c0_100, %c0_101] : memref<9x2x32xf32, #tpu.memory_space<vmem>>, vector<1x2x32xf32>
    %523 = vector.shape_cast %522 : vector<1x2x32xf32> to vector<2x32xf32>
    %524 = vector.shape_cast %520 : vector<2x32xf32> to vector<1x2x32xf32>
    tpu.vector_store %arg5[%521, %c0_100, %c0_101], %524 {strides = array<i32>} : memref<9x2x32xf32, #tpu.memory_space<vmem>>, vector<1x2x32xf32>,
    %c8_i32 = arith.constant 8 : i32
    %525 = arith.index_cast %c8_i32 : i32 to index
    %c0_102 = arith.constant 0 : index
    %c0_103 = arith.constant 0 : index
    %526 = vector.load %arg1[%525, %c0_102, %c0_103] : memref<9x2x128xf32, #tpu.memory_space<vmem>>, vector<1x2x128xf32>
    %527 = vector.shape_cast %526 : vector<1x2x128xf32> to vector<2x128xf32>
    %528 = arith.truncf %490 : vector<2x32xf32> to vector<2x32xbf16>
    %cst_104 = arith.constant dense<0.000000e+00> : vector<2x128xf32>
    %529 = tpu.matmul %528, %0, %cst_104 {dimension_numbers = #tpu.dot_dimension_numbers<[1], [0], [0], [1], [0, 0, 1, 1], [], []>} : vector<2x32xbf16>, vector<32x128xbf16>, vector<2x128xf32> -> vector<2x128xf32>
    %530 = arith.addf %527, %529 : vector<2x128xf32>
    %531 = vector.extract_strided_slice %530 {offsets = [0, 0], sizes = [2, 32], strides = [1, 1]} : vector<2x128xf32> to vector<2x32xf32>
    %532 = arith.negf %531 : vector<2x32xf32>
    %533 = math.exp %532 : vector<2x32xf32>
    %cst_105 = arith.constant 1.000000e+00 : f32
    %534 = vector.broadcast %cst_105 : f32 to vector<2x32xf32>
    %535 = arith.addf %534, %533 : vector<2x32xf32>
    %536 = arith.divf %534, %535 : vector<2x32xf32>
    %537 = vector.extract_strided_slice %530 {offsets = [0, 32], sizes = [2, 32], strides = [1, 1]} : vector<2x128xf32> to vector<2x32xf32>
    %538 = arith.negf %537 : vector<2x32xf32>
    %539 = math.exp %538 : vector<2x32xf32>
    %cst_106 = arith.constant 1.000000e+00 : f32
    %540 = vector.broadcast %cst_106 : f32 to vector<2x32xf32>
    %541 = arith.addf %540, %539 : vector<2x32xf32>
    %542 = arith.divf %540, %541 : vector<2x32xf32>
    %543 = vector.extract_strided_slice %530 {offsets = [0, 64], sizes = [2, 32], strides = [1, 1]} : vector<2x128xf32> to vector<2x32xf32>
    %544 = math.tanh %543 : vector<2x32xf32>
    %545 = vector.extract_strided_slice %530 {offsets = [0, 96], sizes = [2, 32], strides = [1, 1]} : vector<2x128xf32> to vector<2x32xf32>
    %546 = arith.negf %545 : vector<2x32xf32>
    %547 = math.exp %546 : vector<2x32xf32>
    %cst_107 = arith.constant 1.000000e+00 : f32
    %548 = vector.broadcast %cst_107 : f32 to vector<2x32xf32>
    %549 = arith.addf %548, %547 : vector<2x32xf32>
    %550 = arith.divf %548, %549 : vector<2x32xf32>
    %551 = arith.mulf %542, %488 : vector<2x32xf32>
    %552 = arith.mulf %536, %544 : vector<2x32xf32>
    %553 = arith.addf %551, %552 : vector<2x32xf32>
    %554 = math.tanh %553 : vector<2x32xf32>
    %555 = arith.mulf %550, %554 : vector<2x32xf32>
    %556 = tpu.concatenate %555, %520 in 1 : vector<2x32xf32>, vector<2x32xf32> -> vector<2x64xf32>
    %557 = arith.truncf %556 : vector<2x64xf32> to vector<2x64xbf16>
    %cst_108 = arith.constant dense<0.000000e+00> : vector<2x128xf32>
    %558 = tpu.matmul %557, %1, %cst_108 {dimension_numbers = #tpu.dot_dimension_numbers<[1], [0], [0], [1], [0, 0, 1, 1], [], []>} : vector<2x64xbf16>, vector<64x128xbf16>, vector<2x128xf32> -> vector<2x128xf32>
    %559 = vector.broadcast %2 : vector<1x128xf32> to vector<2x128xf32>
    %560 = arith.addf %558, %559 : vector<2x128xf32>
    %561 = vector.extract_strided_slice %560 {offsets = [0, 0], sizes = [2, 32], strides = [1, 1]} : vector<2x128xf32> to vector<2x32xf32>
    %562 = arith.negf %561 : vector<2x32xf32>
    %563 = math.exp %562 : vector<2x32xf32>
    %cst_109 = arith.constant 1.000000e+00 : f32
    %564 = vector.broadcast %cst_109 : f32 to vector<2x32xf32>
    %565 = arith.addf %564, %563 : vector<2x32xf32>
    %566 = arith.divf %564, %565 : vector<2x32xf32>
    %567 = vector.extract_strided_slice %560 {offsets = [0, 32], sizes = [2, 32], strides = [1, 1]} : vector<2x128xf32> to vector<2x32xf32>
    %568 = arith.negf %567 : vector<2x32xf32>
    %569 = math.exp %568 : vector<2x32xf32>
    %cst_110 = arith.constant 1.000000e+00 : f32
    %570 = vector.broadcast %cst_110 : f32 to vector<2x32xf32>
    %571 = arith.addf %570, %569 : vector<2x32xf32>
    %572 = arith.divf %570, %571 : vector<2x32xf32>
    %573 = vector.extract_strided_slice %560 {offsets = [0, 64], sizes = [2, 32], strides = [1, 1]} : vector<2x128xf32> to vector<2x32xf32>
    %574 = math.tanh %573 : vector<2x32xf32>
    %575 = vector.extract_strided_slice %560 {offsets = [0, 96], sizes = [2, 32], strides = [1, 1]} : vector<2x128xf32> to vector<2x32xf32>
    %576 = arith.negf %575 : vector<2x32xf32>
    %577 = math.exp %576 : vector<2x32xf32>
    %cst_111 = arith.constant 1.000000e+00 : f32
    %578 = vector.broadcast %cst_111 : f32 to vector<2x32xf32>
    %579 = arith.addf %578, %577 : vector<2x32xf32>
    %580 = arith.divf %578, %579 : vector<2x32xf32>
    %581 = arith.mulf %572, %518 : vector<2x32xf32>
    %582 = arith.mulf %566, %574 : vector<2x32xf32>
    %583 = arith.addf %581, %582 : vector<2x32xf32>
    %584 = math.tanh %583 : vector<2x32xf32>
    %585 = arith.mulf %580, %584 : vector<2x32xf32>
    %586 = arith.index_cast %c8_i32 : i32 to index
    %c0_112 = arith.constant 0 : index
    %c0_113 = arith.constant 0 : index
    %587 = vector.load %arg5[%586, %c0_112, %c0_113] : memref<9x2x32xf32, #tpu.memory_space<vmem>>, vector<1x2x32xf32>
    %588 = vector.shape_cast %587 : vector<1x2x32xf32> to vector<2x32xf32>
    %589 = vector.shape_cast %585 : vector<2x32xf32> to vector<1x2x32xf32>
    tpu.vector_store %arg5[%586, %c0_112, %c0_113], %589 {strides = array<i32>} : memref<9x2x32xf32, #tpu.memory_space<vmem>>, vector<1x2x32xf32>,
    %c9_i32 = arith.constant 9 : i32
    return
  }
  func.func @transform_0(%arg0: i32) -> (i32, i32, i32) {
    %c0_i32 = arith.constant 0 : i32
    %c0_i32_0 = arith.constant 0 : i32
    %c0_i32_1 = arith.constant 0 : i32
    %c0_i32_2 = arith.constant 0 : i32
    return %c0_i32, %c0_i32_0, %c0_i32_1 : i32, i32, i32
  }
  func.func @transform_1(%arg0: i32) -> (i32, i32) {
    %c0_i32 = arith.constant 0 : i32
    %c0_i32_0 = arith.constant 0 : i32
    %c0_i32_1 = arith.constant 0 : i32
    return %c0_i32, %c0_i32_0 : i32, i32
  }
  func.func @transform_2(%arg0: i32) -> (i32, i32) {
    %c0_i32 = arith.constant 0 : i32
    %c0_i32_0 = arith.constant 0 : i32
    %c0_i32_1 = arith.constant 0 : i32
    return %c0_i32, %c0_i32_0 : i32, i32
  }
  func.func @transform_3(%arg0: i32) -> (i32, i32) {
    %c0_i32 = arith.constant 0 : i32
    %c0_i32_0 = arith.constant 0 : i32
    %c0_i32_1 = arith.constant 0 : i32
    return %c0_i32, %c0_i32_0 : i32, i32
  }
  func.func @transform_4(%arg0: i32) -> (i32, i32, i32) {
    %c0_i32 = arith.constant 0 : i32
    %c0_i32_0 = arith.constant 0 : i32
    %c0_i32_1 = arith.constant 0 : i32
    %c0_i32_2 = arith.constant 0 : i32
    return %c0_i32, %c0_i32_0, %c0_i32_1 : i32, i32, i32
  }
}

</mosaic_0001>

<llo_original>
// kernel: tpu_custom_call.1
$region0: #{tpu_custom_call.1}
  #allocation0 [shape = 'u32[]', space=smem, size = 0x4, offset = 0x4, fixed_abs, tag = 'smem constant byte address 0x4 - core index']
  #allocation1 [shape = 'u32[144,128]{1,0:T(1,128)}', space=vmem, size = 0x12000, scoped, tag = 'internal scratch']
  %s0 = inlined_call_operand.hbm [shape: f32[9,2,128], index: 0, kind: input, shape index: {}]
  %s1 = inlined_call_operand.hbm [shape: bf16[32,128], index: 1, kind: input, shape index: {}]
  %s2 = inlined_call_operand.hbm [shape: bf16[64,128], index: 2, kind: input, shape index: {}]
  %s3 = inlined_call_operand.vmem [shape: f32[1,128], index: 3, kind: input, shape index: {}]
  %s4 = inlined_call_operand.hbm [shape: f32[9,2,32], index: 4, kind: output, shape index: {}]
  %s5 = sld [smem:[#allocation0]]
  $region38: #{tpu_custom_call.1} parent=0
    _
  %s7 = ssub.s32 1, %s5
  %s8 = scalar_select 0, %s7, %s5
  $region1: #{tpu_custom_call.1} parent=0
    #allocation2 [shape = 'u8[9216]{0}', space=vmem, size = 0x2400, scoped, tag = 'input window, operand 0, single buffered']
    #allocation3 [shape = 's32[1]{0}', space=sflag, size = 0x4, scoped, tag = 'scoped memory for tpu_custom_call.1']
    #allocation4 [shape = 's32[1]{0}', space=sflag, size = 0x4, scoped, tag = 'scoped memory for tpu_custom_call.1']
    #allocation5 [shape = 'u8[8192]{0}', space=vmem, size = 0x2000, scoped, tag = 'input window, operand 1, single buffered']
    #allocation6 [shape = 's32[1]{0}', space=sflag, size = 0x4, scoped, tag = 'scoped memory for tpu_custom_call.1']
    #allocation7 [shape = 'u8[16384]{0}', space=vmem, size = 0x4000, scoped, tag = 'input window, operand 2, single buffered']
    #allocation8 [shape = 'u8[9216]{0}', space=vmem, size = 0x2400, scoped, tag = 'output window, operand 0, single buffered']
    %9 = vsyncpa [#allocation3], 0
    %10 = vsyncpa [#allocation6], 0
    %11 = vsyncpa [#allocation4], 0
    // Predicated region
    $region2: #{tpu_custom_call.1} parent=1 // pred_check
      _
    $region3: #{tpu_custom_call.1} parent=1 // pred_check_branch
      %13 = sbr.rel (0) target = $region5
    $region4: #{tpu_custom_call.1} parent=1 // pred_region
      %s15 = ssub.s32 288, 288
      %16 = vsyncadd [#allocation3], %s15
      %s17 = sshll.u32 [#allocation2], 4
      %s18 = int_to_ptr.vmem [resolvable:$true] %s17
      %23 = dma.hbm_to_vmem [thread:$0]  %s0, 288, %s18, [#allocation3], 32, 32, 2
    $region5: #{tpu_custom_call.1} parent=1 // pred_fallthru
      _
    // Predicated region
    $region6: #{tpu_custom_call.1} parent=1 // pred_check
      _
    $region7: #{tpu_custom_call.1} parent=1 // pred_check_branch
      %25 = sbr.rel (0) target = $region9
    $region8: #{tpu_custom_call.1} parent=1 // pred_region
      %s27 = ssub.s32 256, 256
      %28 = vsyncadd [#allocation6], %s27
      %s29 = sshll.u32 [#allocation5], 4
      %s30 = int_to_ptr.vmem [resolvable:$true] %s29
      %35 = dma.hbm_to_vmem [thread:$0]  %s1, 256, %s30, [#allocation6], 64, 64, 4
    $region9: #{tpu_custom_call.1} parent=1 // pred_fallthru
      _
    // Predicated region
    $region10: #{tpu_custom_call.1} parent=1 // pred_check
      _
    $region11: #{tpu_custom_call.1} parent=1 // pred_check_branch
      %37 = sbr.rel (0) target = $region13
    $region12: #{tpu_custom_call.1} parent=1 // pred_region
      %s39 = ssub.s32 512, 512
      %40 = vsyncadd [#allocation6], %s39
      %s41 = sshll.u32 [#allocation7], 4
      %s42 = int_to_ptr.vmem [resolvable:$true] %s41
      %47 = dma.hbm_to_vmem [thread:$0]  %s2, 512, %s42, [#allocation6], 64, 64, 4
    $region13: #{tpu_custom_call.1} parent=1 // pred_fallthru
      _
    // Predicated region
    $region14: #{tpu_custom_call.1} parent=1 // pred_check
      _
    $region15: #{tpu_custom_call.1} parent=1 // pred_check_branch
      %49 = sbr.rel (0) target = $region17
    $region16: #{tpu_custom_call.1} parent=1 // pred_region
      _
    $region17: #{tpu_custom_call.1} parent=1 // pred_fallthru
      _
    // Predicated region
    $region18: #{tpu_custom_call.1} parent=1 // pred_check
      _
    $region19: #{tpu_custom_call.1} parent=1 // pred_check_branch
      %51 = sbr.rel (0) target = $region21
    $region20: #{tpu_custom_call.1} parent=1 // pred_region
      %52 = dma.done [#allocation3], 288
    $region21: #{tpu_custom_call.1} parent=1 // pred_fallthru
      _
    // Predicated region
    $region22: #{tpu_custom_call.1} parent=1 // pred_check
      _
    $region23: #{tpu_custom_call.1} parent=1 // pred_check_branch
      %54 = sbr.rel (0) target = $region25
    $region24: #{tpu_custom_call.1} parent=1 // pred_region
      %55 = dma.done [#allocation6], 256
    $region25: #{tpu_custom_call.1} parent=1 // pred_fallthru
      _
    // Predicated region
    $region26: #{tpu_custom_call.1} parent=1 // pred_check
      _
    $region27: #{tpu_custom_call.1} parent=1 // pred_check_branch
      %57 = sbr.rel (0) target = $region29
    $region28: #{tpu_custom_call.1} parent=1 // pred_region
      %58 = dma.done [#allocation6], 512
    $region29: #{tpu_custom_call.1} parent=1 // pred_fallthru
      _
    %v60 = vld [vmem:[#allocation5] sm:$0xf]
    %v61 = vld [vmem:[#allocation5 + $0x4] sm:$0xf]
    %v62 = vld [vmem:[#allocation5 + $0x8] sm:$0xf]
    %v63 = vld [vmem:[#allocation5 + $0xc] sm:$0xf]
    %v64 = vld [vmem:[#allocation7] sm:$0xf]
    %v65 = vld [vmem:[#allocation7 + $0x4] sm:$0xf]
    %v66 = vld [vmem:[#allocation7 + $0x8] sm:$0xf]
    %v67 = vld [vmem:[#allocation7 + $0xc] sm:$0xf]
    %v68 = vld [vmem:[#allocation7 + $0x10] sm:$0xf]
    %v69 = vld [vmem:[#allocation7 + $0x14] sm:$0xf]
    %v70 = vld [vmem:[#allocation7 + $0x18] sm:$0xf]
    %v71 = vld [vmem:[#allocation7 + $0x1c] sm:$0xf]
    %v72 = vld [vmem:[%s3] sm:$0x1]
    %v73 = vld [vmem:[#allocation2] sm:$0x3]
    %v78 = vunpack.c.l.b16 %v60
    %v79 = vunpack.c.l.b16 %v61
    %v80 = vunpack.c.l.b16 %v62
    %v81 = vunpack.c.l.b16 %v63
    %v82 = vpack.c.b16 %v79, %v78
    %v83 = vpack.c.b16 %v81, %v80
    %vm86 = vcmask 261120
    %v88 = vsel %vm86, 0, 0
    %90 = vmatprep.subr.bf16.mxu0 0
    %91 = vmatpush1.bf16.msra.mxu0 0
    %92 = vmatprep.subr.bf16.mxu0 0
    %93 = vmatpush1.bf16.msra.mxu0 0
    %94 = vmatprep.subr.bf16.mxu0 0
    %95 = vmatpush1.bf16.msra.mxu0 0
    %96 = vmatprep.subr.bf16.mxu0 0
    %97 = vmatpush1.bf16.msra.mxu0 0
    %98 = vmatprep.subr.bf16.mxu0 0
    %99 = vmatpush1.bf16.msra.mxu0 0
    %100 = vmatprep.subr.bf16.mxu0 0
    %101 = vmatpush1.bf16.msra.mxu0 0
    %102 = vmatprep.subr.bf16.mxu0 0
    %103 = vmatpush1.bf16.msra.mxu0 %v83
    %104 = vmatprep.subr.bf16.mxu0 0
    %105 = vmatpush1.bf16.msra.mxu0 %v82
    %106 = vmatprep.subr.bf16.mxu0 0
    %107 = vmatpush2.bf16.msra.mxu0 0
    %108 = vmatprep.subr.bf16.mxu0 0
    %109 = vmatpush2.bf16.msra.mxu0 0
    %110 = vmatprep.subr.bf16.mxu0 0
    %111 = vmatpush2.bf16.msra.mxu0 0
    %112 = vmatprep.subr.bf16.mxu0 0
    %113 = vmatpush2.bf16.msra.mxu0 0
    %114 = vmatprep.subr.bf16.mxu0 0
    %115 = vmatpush2.bf16.msra.mxu0 0
    %116 = vmatprep.subr.bf16.mxu0 0
    %117 = vmatpush2.bf16.msra.mxu0 0
    %118 = vmatprep.subr.bf16.mxu0 0
    %119 = vmatpush2.bf16.msra.mxu0 0
    %120 = vmatprep.subr.bf16.mxu0 0
    %121 = vmatpush2.bf16.msra.mxu0 0
    %122 = vmatprep.mubr.bf16.mxu0 0
    %123 = vmatmul.mubr.bf16.gmra.mxu0 %v88
    %v124 = vpop.f32.mrf.mxu0
    %v125 = vadd.f32 0.0, %v124
    %v126 = vpop.f32.mrf.mxu0
    %v127 = vpop.f32.mrf.mxu0
    %v128 = vpop.f32.mrf.mxu0
    %129 = vdwg.mxu0
    %v130 = vadd.f32 %v73, %v125
    %v131 = vxor.u32 %v130, 2147483648
    %v132 = vmul.f32 %v131, 1.442695
    %v133 = vpow.pop %v132
    %v134 = vadd.f32 %v133, 1.0
    %v135 = vrcp.pop %v134
    %v136 = vmul.f32 1.0, %v135
    %v137 = vtanh.pop %v130
    %v138 = vmul.f32 %v136, 0.0
    %140 = vrot.lane.b32.xlu0 %v137, 64
    %v141 = vpop.permute.xlu0 %140
    %v143 = vmul.f32 %v136, %v141
    %145 = vrot.lane.b32.xlu0 %v143, 32
    %v146 = vpop.permute.xlu0 %145
    %v148 = vadd.f32 %v138, %v146
    %v149 = vtanh.pop %v148
    %151 = vrot.lane.b32.xlu0 %v149, 64
    %v152 = vpop.permute.xlu0 %151
    %v154 = vmul.f32 %v136, %v152
    %156 = vrot.lane.b32.xlu0 %v154, 32
    %v157 = vpop.permute.xlu0 %156
    %v159 = vsel %vm86, %v157, 0.0
    %v160 = vpack.c.bf16 %v159, %v159
    %v162 = vlaneseq
    %v163 = vshrl.u32 %v162, 7
    %v164 = vsub.s32 0, %v163
    %v165 = vrot.slane %v72, %v164
    %v175 = vunpack.c.l.b16 %v64
    %v176 = vunpack.c.l.b16 %v65
    %v177 = vunpack.c.l.b16 %v66
    %v178 = vunpack.c.l.b16 %v67
    %v179 = vunpack.c.l.b16 %v68
    %v180 = vunpack.c.l.b16 %v69
    %v181 = vunpack.c.l.b16 %v70
    %v182 = vunpack.c.l.b16 %v71
    %v183 = vpack.c.b16 %v176, %v175
    %v184 = vpack.c.b16 %v178, %v177
    %v185 = vpack.c.b16 %v180, %v179
    %v186 = vpack.c.b16 %v182, %v181
    %vm191 = vcmask 523264
    %v193 = vsel %vm191, %v160, 0
    %195 = vmatprep.subr.bf16.mxu0 0
    %196 = vmatpush1.bf16.msra.mxu0 0
    %197 = vmatprep.subr.bf16.mxu0 0
    %198 = vmatpush1.bf16.msra.mxu0 0
    %199 = vmatprep.subr.bf16.mxu0 0
    %200 = vmatpush1.bf16.msra.mxu0 0
    %201 = vmatprep.subr.bf16.mxu0 0
    %202 = vmatpush1.bf16.msra.mxu0 0
    %203 = vmatprep.subr.bf16.mxu0 0
    %204 = vmatpush1.bf16.msra.mxu0 %v186
    %205 = vmatprep.subr.bf16.mxu0 0
    %206 = vmatpush1.bf16.msra.mxu0 %v185
    %207 = vmatprep.subr.bf16.mxu0 0
    %208 = vmatpush1.bf16.msra.mxu0 %v184
    %209 = vmatprep.subr.bf16.mxu0 0
    %210 = vmatpush1.bf16.msra.mxu0 %v183
    %211 = vmatprep.subr.bf16.mxu0 0
    %212 = vmatpush2.bf16.msra.mxu0 0
    %213 = vmatprep.subr.bf16.mxu0 0
    %214 = vmatpush2.bf16.msra.mxu0 0
    %215 = vmatprep.subr.bf16.mxu0 0
    %216 = vmatpush2.bf16.msra.mxu0 0
    %217 = vmatprep.subr.bf16.mxu0 0
    %218 = vmatpush2.bf16.msra.mxu0 0
    %219 = vmatprep.subr.bf16.mxu0 0
    %220 = vmatpush2.bf16.msra.mxu0 0
    %221 = vmatprep.subr.bf16.mxu0 0
    %222 = vmatpush2.bf16.msra.mxu0 0
    %223 = vmatprep.subr.bf16.mxu0 0
    %224 = vmatpush2.bf16.msra.mxu0 0
    %225 = vmatprep.subr.bf16.mxu0 0
    %226 = vmatpush2.bf16.msra.mxu0 0
    %227 = vmatprep.mubr.bf16.mxu0 0
    %228 = vmatmul.mubr.bf16.gmra.mxu0 %v193
    %v229 = vpop.f32.mrf.mxu0
    %v230 = vadd.f32 %v165, %v229
    %v231 = vpop.f32.mrf.mxu0
    %v232 = vpop.f32.mrf.mxu0
    %v233 = vpop.f32.mrf.mxu0
    %234 = vdwg.mxu0
    %v235 = vxor.u32 %v230, 2147483648
    %v236 = vmul.f32 %v235, 1.442695
    %v237 = vpow.pop %v236
    %v238 = vadd.f32 %v237, 1.0
    %v239 = vrcp.pop %v238
    %v240 = vmul.f32 1.0, %v239
    %v241 = vtanh.pop %v230
    %v242 = vmul.f32 %v240, 0.0
    %244 = vrot.lane.b32.xlu0 %v241, 64
    %v245 = vpop.permute.xlu0 %244
    %v247 = vmul.f32 %v240, %v245
    %249 = vrot.lane.b32.xlu0 %v247, 32
    %v250 = vpop.permute.xlu0 %249
    %v252 = vadd.f32 %v242, %v250
    %v253 = vtanh.pop %v252
    %255 = vrot.lane.b32.xlu0 %v253, 64
    %v256 = vpop.permute.xlu0 %255
    %v258 = vmul.f32 %v240, %v256
    %260 = vrot.lane.b32.xlu0 %v258, 32
    %v261 = vpop.permute.xlu0 %260
    %vm263 = vcmask 254976
    %264 = vst.msk [vmem:[#allocation8] sm:$0x3] %vm263, %v261
    %s265 = scalar_lea.vmem [#allocation2], 2
    %v266 = vld [vmem:[%s265] sm:$0x3]
    %v267 = vpack.c.bf16 %v154, %v154
    %269 = vrot.lane.b32.xlu0 %v267, 32
    %v270 = vpop.permute.xlu0 %269
    %v272 = vsel %vm86, %v270, 0
    %274 = vmatprep.subr.bf16.mxu0 0
    %275 = vmatpush1.bf16.msra.mxu0 0
    %276 = vmatprep.subr.bf16.mxu0 0
    %277 = vmatpush1.bf16.msra.mxu0 0
    %278 = vmatprep.subr.bf16.mxu0 0
    %279 = vmatpush1.bf16.msra.mxu0 0
    %280 = vmatprep.subr.bf16.mxu0 0
    %281 = vmatpush1.bf16.msra.mxu0 0
    %282 = vmatprep.subr.bf16.mxu0 0
    %283 = vmatpush1.bf16.msra.mxu0 0
    %284 = vmatprep.subr.bf16.mxu0 0
    %285 = vmatpush1.bf16.msra.mxu0 0
    %286 = vmatprep.subr.bf16.mxu0 0
    %287 = vmatpush1.bf16.msra.mxu0 %v83
    %288 = vmatprep.subr.bf16.mxu0 0
    %289 = vmatpush1.bf16.msra.mxu0 %v82
    %290 = vmatprep.subr.bf16.mxu0 0
    %291 = vmatpush2.bf16.msra.mxu0 0
    %292 = vmatprep.subr.bf16.mxu0 0
    %293 = vmatpush2.bf16.msra.mxu0 0
    %294 = vmatprep.subr.bf16.mxu0 0
    %295 = vmatpush2.bf16.msra.mxu0 0
    %296 = vmatprep.subr.bf16.mxu0 0
    %297 = vmatpush2.bf16.msra.mxu0 0
    %298 = vmatprep.subr.bf16.mxu0 0
    %299 = vmatpush2.bf16.msra.mxu0 0
    %300 = vmatprep.subr.bf16.mxu0 0
    %301 = vmatpush2.bf16.msra.mxu0 0
    %302 = vmatprep.subr.bf16.mxu0 0
    %303 = vmatpush2.bf16.msra.mxu0 0
    %304 = vmatprep.subr.bf16.mxu0 0
    %305 = vmatpush2.bf16.msra.mxu0 0
    %306 = vmatprep.mubr.bf16.mxu0 0
    %307 = vmatmul.mubr.bf16.gmra.mxu0 %v272
    %v308 = vpop.f32.mrf.mxu0
    %v309 = vadd.f32 0.0, %v308
    %v310 = vpop.f32.mrf.mxu0
    %v311 = vpop.f32.mrf.mxu0
    %v312 = vpop.f32.mrf.mxu0
    %313 = vdwg.mxu0
    %v314 = vadd.f32 %v266, %v309
    %v315 = vxor.u32 %v314, 2147483648
    %v316 = vmul.f32 %v315, 1.442695
    %v317 = vpow.pop %v316
    %v318 = vadd.f32 %v317, 1.0
    %v319 = vrcp.pop %v318
    %v320 = vmul.f32 1.0, %v319
    %v321 = vtanh.pop %v314
    %v322 = vmul.f32 %v320, %v148
    %324 = vrot.lane.b32.xlu0 %v321, 64
    %v325 = vpop.permute.xlu0 %324
    %v327 = vmul.f32 %v320, %v325
    %329 = vrot.lane.b32.xlu0 %v327, 32
    %v330 = vpop.permute.xlu0 %329
    %v332 = vadd.f32 %v322, %v330
    %v333 = vtanh.pop %v332
    %335 = vrot.lane.b32.xlu0 %v333, 64
    %v336 = vpop.permute.xlu0 %335
    %v338 = vmul.f32 %v320, %v336
    %340 = vrot.lane.b32.xlu0 %v338, 32
    %v341 = vpop.permute.xlu0 %340
    %343 = vrot.lane.b32.xlu0 %v258, 64
    %v344 = vpop.permute.xlu0 %343
    %v346 = vsel %vm86, %v341, %v344
    %v347 = vpack.c.bf16 %v346, %v346
    %v349 = vsel %vm191, %v347, 0
    %351 = vmatprep.subr.bf16.mxu0 0
    %352 = vmatpush1.bf16.msra.mxu0 0
    %353 = vmatprep.subr.bf16.mxu0 0
    %354 = vmatpush1.bf16.msra.mxu0 0
    %355 = vmatprep.subr.bf16.mxu0 0
    %356 = vmatpush1.bf16.msra.mxu0 0
    %357 = vmatprep.subr.bf16.mxu0 0
    %358 = vmatpush1.bf16.msra.mxu0 0
    %359 = vmatprep.subr.bf16.mxu0 0
    %360 = vmatpush1.bf16.msra.mxu0 %v186
    %361 = vmatprep.subr.bf16.mxu0 0
    %362 = vmatpush1.bf16.msra.mxu0 %v185
    %363 = vmatprep.subr.bf16.mxu0 0
    %364 = vmatpush1.bf16.msra.mxu0 %v184
    %365 = vmatprep.subr.bf16.mxu0 0
    %366 = vmatpush1.bf16.msra.mxu0 %v183
    %367 = vmatprep.subr.bf16.mxu0 0
    %368 = vmatpush2.bf16.msra.mxu0 0
    %369 = vmatprep.subr.bf16.mxu0 0
    %370 = vmatpush2.bf16.msra.mxu0 0
    %371 = vmatprep.subr.bf16.mxu0 0
    %372 = vmatpush2.bf16.msra.mxu0 0
    %373 = vmatprep.subr.bf16.mxu0 0
    %374 = vmatpush2.bf16.msra.mxu0 0
    %375 = vmatprep.subr.bf16.mxu0 0
    %376 = vmatpush2.bf16.msra.mxu0 0
    %377 = vmatprep.subr.bf16.mxu0 0
    %378 = vmatpush2.bf16.msra.mxu0 0
    %379 = vmatprep.subr.bf16.mxu0 0
    %380 = vmatpush2.bf16.msra.mxu0 0
    %381 = vmatprep.subr.bf16.mxu0 0
    %382 = vmatpush2.bf16.msra.mxu0 0
    %383 = vmatprep.mubr.bf16.mxu0 0
    %384 = vmatmul.mubr.bf16.gmra.mxu0 %v349
    %v385 = vpop.f32.mrf.mxu0
    %v386 = vadd.f32 %v165, %v385
    %v387 = vpop.f32.mrf.mxu0
    %v388 = vpop.f32.mrf.mxu0
    %v389 = vpop.f32.mrf.mxu0
    %390 = vdwg.mxu0
    %v391 = vxor.u32 %v386, 2147483648
    %v392 = vmul.f32 %v391, 1.442695
    %v393 = vpow.pop %v392
    %v394 = vadd.f32 %v393, 1.0
    %v395 = vrcp.pop %v394
    %v396 = vmul.f32 1.0, %v395
    %v397 = vtanh.pop %v386
    %v398 = vmul.f32 %v396, %v252
    %400 = vrot.lane.b32.xlu0 %v397, 64
    %v401 = vpop.permute.xlu0 %400
    %v403 = vmul.f32 %v396, %v401
    %405 = vrot.lane.b32.xlu0 %v403, 32
    %v406 = vpop.permute.xlu0 %405
    %v408 = vadd.f32 %v398, %v406
    %v409 = vtanh.pop %v408
    %411 = vrot.lane.b32.xlu0 %v409, 64
    %v412 = vpop.permute.xlu0 %411
    %v414 = vmul.f32 %v396, %v412
    %416 = vrot.lane.b32.xlu0 %v414, 32
    %v417 = vpop.permute.xlu0 %416
    %s419 = scalar_lea.vmem [#allocation8], 2
    %420 = vst.msk [vmem:[%s419] sm:$0x3] %vm263, %v417
    %s421 = scalar_lea.vmem [#allocation2], 4
    %v422 = vld [vmem:[%s421] sm:$0x3]
    %v423 = vpack.c.bf16 %v338, %v338
    %425 = vrot.lane.b32.xlu0 %v423, 32
    %v426 = vpop.permute.xlu0 %425
    %v428 = vsel %vm86, %v426, 0
    %430 = vmatprep.subr.bf16.mxu0 0
    %431 = vmatpush1.bf16.msra.mxu0 0
    %432 = vmatprep.subr.bf16.mxu0 0
    %433 = vmatpush1.bf16.msra.mxu0 0
    %434 = vmatprep.subr.bf16.mxu0 0
    %435 = vmatpush1.bf16.msra.mxu0 0
    %436 = vmatprep.subr.bf16.mxu0 0
    %437 = vmatpush1.bf16.msra.mxu0 0
    %438 = vmatprep.subr.bf16.mxu0 0
    %439 = vmatpush1.bf16.msra.mxu0 0
    %440 = vmatprep.subr.bf16.mxu0 0
    %441 = vmatpush1.bf16.msra.mxu0 0
    %442 = vmatprep.subr.bf16.mxu0 0
    %443 = vmatpush1.bf16.msra.mxu0 %v83
    %444 = vmatprep.subr.bf16.mxu0 0
    %445 = vmatpush1.bf16.msra.mxu0 %v82
    %446 = vmatprep.subr.bf16.mxu0 0
    %447 = vmatpush2.bf16.msra.mxu0 0
    %448 = vmatprep.subr.bf16.mxu0 0
    %449 = vmatpush2.bf16.msra.mxu0 0
    %450 = vmatprep.subr.bf16.mxu0 0
    %451 = vmatpush2.bf16.msra.mxu0 0
    %452 = vmatprep.subr.bf16.mxu0 0
    %453 = vmatpush2.bf16.msra.mxu0 0
    %454 = vmatprep.subr.bf16.mxu0 0
    %455 = vmatpush2.bf16.msra.mxu0 0
    %456 = vmatprep.subr.bf16.mxu0 0
    %457 = vmatpush2.bf16.msra.mxu0 0
    %458 = vmatprep.subr.bf16.mxu0 0
    %459 = vmatpush2.bf16.msra.mxu0 0
    %460 = vmatprep.subr.bf16.mxu0 0
    %461 = vmatpush2.bf16.msra.mxu0 0
    %462 = vmatprep.mubr.bf16.mxu0 0
    %463 = vmatmul.mubr.bf16.gmra.mxu0 %v428
    %v464 = vpop.f32.mrf.mxu0
    %v465 = vadd.f32 0.0, %v464
    %v466 = vpop.f32.mrf.mxu0
    %v467 = vpop.f32.mrf.mxu0
    %v468 = vpop.f32.mrf.mxu0
    %469 = vdwg.mxu0
    %v470 = vadd.f32 %v422, %v465
    %v471 = vxor.u32 %v470, 2147483648
    %v472 = vmul.f32 %v471, 1.442695
    %v473 = vpow.pop %v472
    %v474 = vadd.f32 %v473, 1.0
    %v475 = vrcp.pop %v474
    %v476 = vmul.f32 1.0, %v475
    %v477 = vtanh.pop %v470
    %v478 = vmul.f32 %v476, %v332
    %480 = vrot.lane.b32.xlu0 %v477, 64
    %v481 = vpop.permute.xlu0 %480
    %v483 = vmul.f32 %v476, %v481
    %485 = vrot.lane.b32.xlu0 %v483, 32
    %v486 = vpop.permute.xlu0 %485
    %v488 = vadd.f32 %v478, %v486
    %v489 = vtanh.pop %v488
    %491 = vrot.lane.b32.xlu0 %v489, 64
    %v492 = vpop.permute.xlu0 %491
    %v494 = vmul.f32 %v476, %v492
    %496 = vrot.lane.b32.xlu0 %v494, 32
    %v497 = vpop.permute.xlu0 %496
    %499 = vrot.lane.b32.xlu0 %v414, 64
    %v500 = vpop.permute.xlu0 %499
    %v502 = vsel %vm86, %v497, %v500
    %v503 = vpack.c.bf16 %v502, %v502
    %v505 = vsel %vm191, %v503, 0
    %507 = vmatprep.subr.bf16.mxu0 0
    %508 = vmatpush1.bf16.msra.mxu0 0
    %509 = vmatprep.subr.bf16.mxu0 0
    %510 = vmatpush1.bf16.msra.mxu0 0
    %511 = vmatprep.subr.bf16.mxu0 0
    %512 = vmatpush1.bf16.msra.mxu0 0
    %513 = vmatprep.subr.bf16.mxu0 0
    %514 = vmatpush1.bf16.msra.mxu0 0
    %515 = vmatprep.subr.bf16.mxu0 0
    %516 = vmatpush1.bf16.msra.mxu0 %v186
    %517 = vmatprep.subr.bf16.mxu0 0
    %518 = vmatpush1.bf16.msra.mxu0 %v185
    %519 = vmatprep.subr.bf16.mxu0 0
    %520 = vmatpush1.bf16.msra.mxu0 %v184
    %521 = vmatprep.subr.bf16.mxu0 0
    %522 = vmatpush1.bf16.msra.mxu0 %v183
    %523 = vmatprep.subr.bf16.mxu0 0
    %524 = vmatpush2.bf16.msra.mxu0 0
    %525 = vmatprep.subr.bf16.mxu0 0
    %526 = vmatpush2.bf16.msra.mxu0 0
    %527 = vmatprep.subr.bf16.mxu0 0
    %528 = vmatpush2.bf16.msra.mxu0 0
    %529 = vmatprep.subr.bf16.mxu0 0
    %530 = vmatpush2.bf16.msra.mxu0 0
    %531 = vmatprep.subr.bf16.mxu0 0
    %532 = vmatpush2.bf16.msra.mxu0 0
    %533 = vmatprep.subr.bf16.mxu0 0
    %534 = vmatpush2.bf16.msra.mxu0 0
    %535 = vmatprep.subr.bf16.mxu0 0
    %536 = vmatpush2.bf16.msra.mxu0 0
    %537 = vmatprep.subr.bf16.mxu0 0
    %538 = vmatpush2.bf16.msra.mxu0 0
    %539 = vmatprep.mubr.bf16.mxu0 0
    %540 = vmatmul.mubr.bf16.gmra.mxu0 %v505
    %v541 = vpop.f32.mrf.mxu0
    %v542 = vadd.f32 %v165, %v541
    %v543 = vpop.f32.mrf.mxu0
    %v544 = vpop.f32.mrf.mxu0
    %v545 = vpop.f32.mrf.mxu0
    %546 = vdwg.mxu0
    %v547 = vxor.u32 %v542, 2147483648
    %v548 = vmul.f32 %v547, 1.442695
    %v549 = vpow.pop %v548
    %v550 = vadd.f32 %v549, 1.0
    %v551 = vrcp.pop %v550
    %v552 = vmul.f32 1.0, %v551
    %v553 = vtanh.pop %v542
    %v554 = vmul.f32 %v552, %v408
    %556 = vrot.lane.b32.xlu0 %v553, 64
    %v557 = vpop.permute.xlu0 %556
    %v559 = vmul.f32 %v552, %v557
    %561 = vrot.lane.b32.xlu0 %v559, 32
    %v562 = vpop.permute.xlu0 %561
    %v564 = vadd.f32 %v554, %v562
    %v565 = vtanh.pop %v564
    %567 = vrot.lane.b32.xlu0 %v565, 64
    %v568 = vpop.permute.xlu0 %567
    %v570 = vmul.f32 %v552, %v568
    %572 = vrot.lane.b32.xlu0 %v570, 32
    %v573 = vpop.permute.xlu0 %572
    %s575 = scalar_lea.vmem [#allocation8], 4
    %576 = vst.msk [vmem:[%s575] sm:$0x3] %vm263, %v573
    %s577 = scalar_lea.vmem [#allocation2], 6
    %v578 = vld [vmem:[%s577] sm:$0x3]
    %v579 = vpack.c.bf16 %v494, %v494
    %581 = vrot.lane.b32.xlu0 %v579, 32
    %v582 = vpop.permute.xlu0 %581
    %v584 = vsel %vm86, %v582, 0
    %586 = vmatprep.subr.bf16.mxu0 0
    %587 = vmatpush1.bf16.msra.mxu0 0
    %588 = vmatprep.subr.bf16.mxu0 0
    %589 = vmatpush1.bf16.msra.mxu0 0
    %590 = vmatprep.subr.bf16.mxu0 0
    %591 = vmatpush1.bf16.msra.mxu0 0
    %592 = vmatprep.subr.bf16.mxu0 0
    %593 = vmatpush1.bf16.msra.mxu0 0
    %594 = vmatprep.subr.bf16.mxu0 0
    %595 = vmatpush1.bf16.msra.mxu0 0
    %596 = vmatprep.subr.bf16.mxu0 0
    %597 = vmatpush1.bf16.msra.mxu0 0
    %598 = vmatprep.subr.bf16.mxu0 0
    %599 = vmatpush1.bf16.msra.mxu0 %v83
    %600 = vmatprep.subr.bf16.mxu0 0
    %601 = vmatpush1.bf16.msra.mxu0 %v82
    %602 = vmatprep.subr.bf16.mxu0 0
    %603 = vmatpush2.bf16.msra.mxu0 0
    %604 = vmatprep.subr.bf16.mxu0 0
    %605 = vmatpush2.bf16.msra.mxu0 0
    %606 = vmatprep.subr.bf16.mxu0 0
    %607 = vmatpush2.bf16.msra.mxu0 0
    %608 = vmatprep.subr.bf16.mxu0 0
    %609 = vmatpush2.bf16.msra.mxu0 0
    %610 = vmatprep.subr.bf16.mxu0 0
    %611 = vmatpush2.bf16.msra.mxu0 0
    %612 = vmatprep.subr.bf16.mxu0 0
    %613 = vmatpush2.bf16.msra.mxu0 0
    %614 = vmatprep.subr.bf16.mxu0 0
    %615 = vmatpush2.bf16.msra.mxu0 0
    %616 = vmatprep.subr.bf16.mxu0 0
    %617 = vmatpush2.bf16.msra.mxu0 0
    %618 = vmatprep.mubr.bf16.mxu0 0
    %619 = vmatmul.mubr.bf16.gmra.mxu0 %v584
    %v620 = vpop.f32.mrf.mxu0
    %v621 = vadd.f32 0.0, %v620
    %v622 = vpop.f32.mrf.mxu0
    %v623 = vpop.f32.mrf.mxu0
    %v624 = vpop.f32.mrf.mxu0
    %625 = vdwg.mxu0
    %v626 = vadd.f32 %v578, %v621
    %v627 = vxor.u32 %v626, 2147483648
    %v628 = vmul.f32 %v627, 1.442695
    %v629 = vpow.pop %v628
    %v630 = vadd.f32 %v629, 1.0
    %v631 = vrcp.pop %v630
    %v632 = vmul.f32 1.0, %v631
    %v633 = vtanh.pop %v626
    %v634 = vmul.f32 %v632, %v488
    %636 = vrot.lane.b32.xlu0 %v633, 64
    %v637 = vpop.permute.xlu0 %636
    %v639 = vmul.f32 %v632, %v637
    %641 = vrot.lane.b32.xlu0 %v639, 32
    %v642 = vpop.permute.xlu0 %641
    %v644 = vadd.f32 %v634, %v642
    %v645 = vtanh.pop %v644
    %647 = vrot.lane.b32.xlu0 %v645, 64
    %v648 = vpop.permute.xlu0 %647
    %v650 = vmul.f32 %v632, %v648
    %652 = vrot.lane.b32.xlu0 %v650, 32
    %v653 = vpop.permute.xlu0 %652
    %655 = vrot.lane.b32.xlu0 %v570, 64
    %v656 = vpop.permute.xlu0 %655
    %v658 = vsel %vm86, %v653, %v656
    %v659 = vpack.c.bf16 %v658, %v658
    %v661 = vsel %vm191, %v659, 0
    %663 = vmatprep.subr.bf16.mxu0 0
    %664 = vmatpush1.bf16.msra.mxu0 0
    %665 = vmatprep.subr.bf16.mxu0 0
    %666 = vmatpush1.bf16.msra.mxu0 0
    %667 = vmatprep.subr.bf16.mxu0 0
    %668 = vmatpush1.bf16.msra.mxu0 0
    %669 = vmatprep.subr.bf16.mxu0 0
    %670 = vmatpush1.bf16.msra.mxu0 0
    %671 = vmatprep.subr.bf16.mxu0 0
    %672 = vmatpush1.bf16.msra.mxu0 %v186
    %673 = vmatprep.subr.bf16.mxu0 0
    %674 = vmatpush1.bf16.msra.mxu0 %v185
    %675 = vmatprep.subr.bf16.mxu0 0
    %676 = vmatpush1.bf16.msra.mxu0 %v184
    %677 = vmatprep.subr.bf16.mxu0 0
    %678 = vmatpush1.bf16.msra.mxu0 %v183
    %679 = vmatprep.subr.bf16.mxu0 0
    %680 = vmatpush2.bf16.msra.mxu0 0
    %681 = vmatprep.subr.bf16.mxu0 0
    %682 = vmatpush2.bf16.msra.mxu0 0
    %683 = vmatprep.subr.bf16.mxu0 0
    %684 = vmatpush2.bf16.msra.mxu0 0
    %685 = vmatprep.subr.bf16.mxu0 0
    %686 = vmatpush2.bf16.msra.mxu0 0
    %687 = vmatprep.subr.bf16.mxu0 0
    %688 = vmatpush2.bf16.msra.mxu0 0
    %689 = vmatprep.subr.bf16.mxu0 0
    %690 = vmatpush2.bf16.msra.mxu0 0
    %691 = vmatprep.subr.bf16.mxu0 0
    %692 = vmatpush2.bf16.msra.mxu0 0
    %693 = vmatprep.subr.bf16.mxu0 0
    %694 = vmatpush2.bf16.msra.mxu0 0
    %695 = vmatprep.mubr.bf16.mxu0 0
    %696 = vmatmul.mubr.bf16.gmra.mxu0 %v661
    %v697 = vpop.f32.mrf.mxu0
    %v698 = vadd.f32 %v165, %v697
    %v699 = vpop.f32.mrf.mxu0
    %v700 = vpop.f32.mrf.mxu0
    %v701 = vpop.f32.mrf.mxu0
    %702 = vdwg.mxu0
    %v703 = vxor.u32 %v698, 2147483648
    %v704 = vmul.f32 %v703, 1.442695
    %v705 = vpow.pop %v704
    %v706 = vadd.f32 %v705, 1.0
    %v707 = vrcp.pop %v706
    %v708 = vmul.f32 1.0, %v707
    %v709 = vtanh.pop %v698
    %v710 = vmul.f32 %v708, %v564
    %712 = vrot.lane.b32.xlu0 %v709, 64
    %v713 = vpop.permute.xlu0 %712
    %v715 = vmul.f32 %v708, %v713
    %717 = vrot.lane.b32.xlu0 %v715, 32
    %v718 = vpop.permute.xlu0 %717
    %v720 = vadd.f32 %v710, %v718
    %v721 = vtanh.pop %v720
    %723 = vrot.lane.b32.xlu0 %v721, 64
    %v724 = vpop.permute.xlu0 %723
    %v726 = vmul.f32 %v708, %v724
    %728 = vrot.lane.b32.xlu0 %v726, 32
    %v729 = vpop.permute.xlu0 %728
    %s731 = scalar_lea.vmem [#allocation8], 6
    %732 = vst.msk [vmem:[%s731] sm:$0x3] %vm263, %v729
    %s733 = scalar_lea.vmem [#allocation2], 8
    %v734 = vld [vmem:[%s733] sm:$0x3]
    %v735 = vpack.c.bf16 %v650, %v650
    %737 = vrot.lane.b32.xlu0 %v735, 32
    %v738 = vpop.permute.xlu0 %737
    %v740 = vsel %vm86, %v738, 0
    %742 = vmatprep.subr.bf16.mxu0 0
    %743 = vmatpush1.bf16.msra.mxu0 0
    %744 = vmatprep.subr.bf16.mxu0 0
    %745 = vmatpush1.bf16.msra.mxu0 0
    %746 = vmatprep.subr.bf16.mxu0 0
    %747 = vmatpush1.bf16.msra.mxu0 0
    %748 = vmatprep.subr.bf16.mxu0 0
    %749 = vmatpush1.bf16.msra.mxu0 0
    %750 = vmatprep.subr.bf16.mxu0 0
    %751 = vmatpush1.bf16.msra.mxu0 0
    %752 = vmatprep.subr.bf16.mxu0 0
    %753 = vmatpush1.bf16.msra.mxu0 0
    %754 = vmatprep.subr.bf16.mxu0 0
    %755 = vmatpush1.bf16.msra.mxu0 %v83
    %756 = vmatprep.subr.bf16.mxu0 0
    %757 = vmatpush1.bf16.msra.mxu0 %v82
    %758 = vmatprep.subr.bf16.mxu0 0
    %759 = vmatpush2.bf16.msra.mxu0 0
    %760 = vmatprep.subr.bf16.mxu0 0
    %761 = vmatpush2.bf16.msra.mxu0 0
    %762 = vmatprep.subr.bf16.mxu0 0
    %763 = vmatpush2.bf16.msra.mxu0 0
    %764 = vmatprep.subr.bf16.mxu0 0
    %765 = vmatpush2.bf16.msra.mxu0 0
    %766 = vmatprep.subr.bf16.mxu0 0
    %767 = vmatpush2.bf16.msra.mxu0 0
    %768 = vmatprep.subr.bf16.mxu0 0
    %769 = vmatpush2.bf16.msra.mxu0 0
    %770 = vmatprep.subr.bf16.mxu0 0
    %771 = vmatpush2.bf16.msra.mxu0 0
    %772 = vmatprep.subr.bf16.mxu0 0
    %773 = vmatpush2.bf16.msra.mxu0 0
    %774 = vmatprep.mubr.bf16.mxu0 0
    %775 = vmatmul.mubr.bf16.gmra.mxu0 %v740
    %v776 = vpop.f32.mrf.mxu0
    %v777 = vadd.f32 0.0, %v776
    %v778 = vpop.f32.mrf.mxu0
    %v779 = vpop.f32.mrf.mxu0
    %v780 = vpop.f32.mrf.mxu0
    %781 = vdwg.mxu0
    %v782 = vadd.f32 %v734, %v777
    %v783 = vxor.u32 %v782, 2147483648
    %v784 = vmul.f32 %v783, 1.442695
    %v785 = vpow.pop %v784
    %v786 = vadd.f32 %v785, 1.0
    %v787 = vrcp.pop %v786
    %v788 = vmul.f32 1.0, %v787
    %v789 = vtanh.pop %v782
    %v790 = vmul.f32 %v788, %v644
    %792 = vrot.lane.b32.xlu0 %v789, 64
    %v793 = vpop.permute.xlu0 %792
    %v795 = vmul.f32 %v788, %v793
    %797 = vrot.lane.b32.xlu0 %v795, 32
    %v798 = vpop.permute.xlu0 %797
    %v800 = vadd.f32 %v790, %v798
    %v801 = vtanh.pop %v800
    %803 = vrot.lane.b32.xlu0 %v801, 64
    %v804 = vpop.permute.xlu0 %803
    %v806 = vmul.f32 %v788, %v804
    %808 = vrot.lane.b32.xlu0 %v806, 32
    %v809 = vpop.permute.xlu0 %808
    %811 = vrot.lane.b32.xlu0 %v726, 64
    %v812 = vpop.permute.xlu0 %811
    %v814 = vsel %vm86, %v809, %v812
    %v815 = vpack.c.bf16 %v814, %v814
    %v817 = vsel %vm191, %v815, 0
    %819 = vmatprep.subr.bf16.mxu0 0
    %820 = vmatpush1.bf16.msra.mxu0 0
    %821 = vmatprep.subr.bf16.mxu0 0
    %822 = vmatpush1.bf16.msra.mxu0 0
    %823 = vmatprep.subr.bf16.mxu0 0
    %824 = vmatpush1.bf16.msra.mxu0 0
    %825 = vmatprep.subr.bf16.mxu0 0
    %826 = vmatpush1.bf16.msra.mxu0 0
    %827 = vmatprep.subr.bf16.mxu0 0
    %828 = vmatpush1.bf16.msra.mxu0 %v186
    %829 = vmatprep.subr.bf16.mxu0 0
    %830 = vmatpush1.bf16.msra.mxu0 %v185
    %831 = vmatprep.subr.bf16.mxu0 0
    %832 = vmatpush1.bf16.msra.mxu0 %v184
    %833 = vmatprep.subr.bf16.mxu0 0
    %834 = vmatpush1.bf16.msra.mxu0 %v183
    %835 = vmatprep.subr.bf16.mxu0 0
    %836 = vmatpush2.bf16.msra.mxu0 0
    %837 = vmatprep.subr.bf16.mxu0 0
    %838 = vmatpush2.bf16.msra.mxu0 0
    %839 = vmatprep.subr.bf16.mxu0 0
    %840 = vmatpush2.bf16.msra.mxu0 0
    %841 = vmatprep.subr.bf16.mxu0 0
    %842 = vmatpush2.bf16.msra.mxu0 0
    %843 = vmatprep.subr.bf16.mxu0 0
    %844 = vmatpush2.bf16.msra.mxu0 0
    %845 = vmatprep.subr.bf16.mxu0 0
    %846 = vmatpush2.bf16.msra.mxu0 0
    %847 = vmatprep.subr.bf16.mxu0 0
    %848 = vmatpush2.bf16.msra.mxu0 0
    %849 = vmatprep.subr.bf16.mxu0 0
    %850 = vmatpush2.bf16.msra.mxu0 0
    %851 = vmatprep.mubr.bf16.mxu0 0
    %852 = vmatmul.mubr.bf16.gmra.mxu0 %v817
    %v853 = vpop.f32.mrf.mxu0
    %v854 = vadd.f32 %v165, %v853
    %v855 = vpop.f32.mrf.mxu0
    %v856 = vpop.f32.mrf.mxu0
    %v857 = vpop.f32.mrf.mxu0
    %858 = vdwg.mxu0
    %v859 = vxor.u32 %v854, 2147483648
    %v860 = vmul.f32 %v859, 1.442695
    %v861 = vpow.pop %v860
    %v862 = vadd.f32 %v861, 1.0
    %v863 = vrcp.pop %v862
    %v864 = vmul.f32 1.0, %v863
    %v865 = vtanh.pop %v854
    %v866 = vmul.f32 %v864, %v720
    %868 = vrot.lane.b32.xlu0 %v865, 64
    %v869 = vpop.permute.xlu0 %868
    %v871 = vmul.f32 %v864, %v869
    %873 = vrot.lane.b32.xlu0 %v871, 32
    %v874 = vpop.permute.xlu0 %873
    %v876 = vadd.f32 %v866, %v874
    %v877 = vtanh.pop %v876
    %879 = vrot.lane.b32.xlu0 %v877, 64
    %v880 = vpop.permute.xlu0 %879
    %v882 = vmul.f32 %v864, %v880
    %884 = vrot.lane.b32.xlu0 %v882, 32
    %v885 = vpop.permute.xlu0 %884
    %s887 = scalar_lea.vmem [#allocation8], 8
    %888 = vst.msk [vmem:[%s887] sm:$0x3] %vm263, %v885
    %s889 = scalar_lea.vmem [#allocation2], 10
    %v890 = vld [vmem:[%s889] sm:$0x3]
    %v891 = vpack.c.bf16 %v806, %v806
    %893 = vrot.lane.b32.xlu0 %v891, 32
    %v894 = vpop.permute.xlu0 %893
    %v896 = vsel %vm86, %v894, 0
    %898 = vmatprep.subr.bf16.mxu0 0
    %899 = vmatpush1.bf16.msra.mxu0 0
    %900 = vmatprep.subr.bf16.mxu0 0
    %901 = vmatpush1.bf16.msra.mxu0 0
    %902 = vmatprep.subr.bf16.mxu0 0
    %903 = vmatpush1.bf16.msra.mxu0 0
    %904 = vmatprep.subr.bf16.mxu0 0
    %905 = vmatpush1.bf16.msra.mxu0 0
    %906 = vmatprep.subr.bf16.mxu0 0
    %907 = vmatpush1.bf16.msra.mxu0 0
    %908 = vmatprep.subr.bf16.mxu0 0
    %909 = vmatpush1.bf16.msra.mxu0 0
    %910 = vmatprep.subr.bf16.mxu0 0
    %911 = vmatpush1.bf16.msra.mxu0 %v83
    %912 = vmatprep.subr.bf16.mxu0 0
    %913 = vmatpush1.bf16.msra.mxu0 %v82
    %914 = vmatprep.subr.bf16.mxu0 0
    %915 = vmatpush2.bf16.msra.mxu0 0
    %916 = vmatprep.subr.bf16.mxu0 0
    %917 = vmatpush2.bf16.msra.mxu0 0
    %918 = vmatprep.subr.bf16.mxu0 0
    %919 = vmatpush2.bf16.msra.mxu0 0
    %920 = vmatprep.subr.bf16.mxu0 0
    %921 = vmatpush2.bf16.msra.mxu0 0
    %922 = vmatprep.subr.bf16.mxu0 0
    %923 = vmatpush2.bf16.msra.mxu0 0
    %924 = vmatprep.subr.bf16.mxu0 0
    %925 = vmatpush2.bf16.msra.mxu0 0
    %926 = vmatprep.subr.bf16.mxu0 0
    %927 = vmatpush2.bf16.msra.mxu0 0
    %928 = vmatprep.subr.bf16.mxu0 0
    %929 = vmatpush2.bf16.msra.mxu0 0
    %930 = vmatprep.mubr.bf16.mxu0 0
    %931 = vmatmul.mubr.bf16.gmra.mxu0 %v896
    %v932 = vpop.f32.mrf.mxu0
    %v933 = vadd.f32 0.0, %v932
    %v934 = vpop.f32.mrf.mxu0
    %v935 = vpop.f32.mrf.mxu0
    %v936 = vpop.f32.mrf.mxu0
    %937 = vdwg.mxu0
    %v938 = vadd.f32 %v890, %v933
    %v939 = vxor.u32 %v938, 2147483648
    %v940 = vmul.f32 %v939, 1.442695
    %v941 = vpow.pop %v940
    %v942 = vadd.f32 %v941, 1.0
    %v943 = vrcp.pop %v942
    %v944 = vmul.f32 1.0, %v943
    %v945 = vtanh.pop %v938
    %v946 = vmul.f32 %v944, %v800
    %948 = vrot.lane.b32.xlu0 %v945, 64
    %v949 = vpop.permute.xlu0 %948
    %v951 = vmul.f32 %v944, %v949
    %953 = vrot.lane.b32.xlu0 %v951, 32
    %v954 = vpop.permute.xlu0 %953
    %v956 = vadd.f32 %v946, %v954
    %v957 = vtanh.pop %v956
    %959 = vrot.lane.b32.xlu0 %v957, 64
    %v960 = vpop.permute.xlu0 %959
    %v962 = vmul.f32 %v944, %v960
    %964 = vrot.lane.b32.xlu0 %v962, 32
    %v965 = vpop.permute.xlu0 %964
    %967 = vrot.lane.b32.xlu0 %v882, 64
    %v968 = vpop.permute.xlu0 %967
    %v970 = vsel %vm86, %v965, %v968
    %v971 = vpack.c.bf16 %v970, %v970
    %v973 = vsel %vm191, %v971, 0
    %975 = vmatprep.subr.bf16.mxu0 0
    %976 = vmatpush1.bf16.msra.mxu0 0
    %977 = vmatprep.subr.bf16.mxu0 0
    %978 = vmatpush1.bf16.msra.mxu0 0
    %979 = vmatprep.subr.bf16.mxu0 0
    %980 = vmatpush1.bf16.msra.mxu0 0
    %981 = vmatprep.subr.bf16.mxu0 0
    %982 = vmatpush1.bf16.msra.mxu0 0
    %983 = vmatprep.subr.bf16.mxu0 0
    %984 = vmatpush1.bf16.msra.mxu0 %v186
    %985 = vmatprep.subr.bf16.mxu0 0
    %986 = vmatpush1.bf16.msra.mxu0 %v185
    %987 = vmatprep.subr.bf16.mxu0 0
    %988 = vmatpush1.bf16.msra.mxu0 %v184
    %989 = vmatprep.subr.bf16.mxu0 0
    %990 = vmatpush1.bf16.msra.mxu0 %v183
    %991 = vmatprep.subr.bf16.mxu0 0
    %992 = vmatpush2.bf16.msra.mxu0 0
    %993 = vmatprep.subr.bf16.mxu0 0
    %994 = vmatpush2.bf16.msra.mxu0 0
    %995 = vmatprep.subr.bf16.mxu0 0
    %996 = vmatpush2.bf16.msra.mxu0 0
    %997 = vmatprep.subr.bf16.mxu0 0
    %998 = vmatpush2.bf16.msra.mxu0 0
    %999 = vmatprep.subr.bf16.mxu0 0
    %1000 = vmatpush2.bf16.msra.mxu0 0
    %1001 = vmatprep.subr.bf16.mxu0 0
    %1002 = vmatpush2.bf16.msra.mxu0 0
    %1003 = vmatprep.subr.bf16.mxu0 0
    %1004 = vmatpush2.bf16.msra.mxu0 0
    %1005 = vmatprep.subr.bf16.mxu0 0
    %1006 = vmatpush2.bf16.msra.mxu0 0
    %1007 = vmatprep.mubr.bf16.mxu0 0
    %1008 = vmatmul.mubr.bf16.gmra.mxu0 %v973
    %v1009 = vpop.f32.mrf.mxu0
    %v1010 = vadd.f32 %v165, %v1009
    %v1011 = vpop.f32.mrf.mxu0
    %v1012 = vpop.f32.mrf.mxu0
    %v1013 = vpop.f32.mrf.mxu0
    %1014 = vdwg.mxu0
    %v1015 = vxor.u32 %v1010, 2147483648
    %v1016 = vmul.f32 %v1015, 1.442695
    %v1017 = vpow.pop %v1016
    %v1018 = vadd.f32 %v1017, 1.0
    %v1019 = vrcp.pop %v1018
    %v1020 = vmul.f32 1.0, %v1019
    %v1021 = vtanh.pop %v1010
    %v1022 = vmul.f32 %v1020, %v876
    %1024 = vrot.lane.b32.xlu0 %v1021, 64
    %v1025 = vpop.permute.xlu0 %1024
    %v1027 = vmul.f32 %v1020, %v1025
    %1029 = vrot.lane.b32.xlu0 %v1027, 32
    %v1030 = vpop.permute.xlu0 %1029
    %v1032 = vadd.f32 %v1022, %v1030
    %v1033 = vtanh.pop %v1032
    %1035 = vrot.lane.b32.xlu0 %v1033, 64
    %v1036 = vpop.permute.xlu0 %1035
    %v1038 = vmul.f32 %v1020, %v1036
    %1040 = vrot.lane.b32.xlu0 %v1038, 32
    %v1041 = vpop.permute.xlu0 %1040
    %s1043 = scalar_lea.vmem [#allocation8], 10
    %1044 = vst.msk [vmem:[%s1043] sm:$0x3] %vm263, %v1041
    %s1045 = scalar_lea.vmem [#allocation2], 12
    %v1046 = vld [vmem:[%s1045] sm:$0x3]
    %v1047 = vpack.c.bf16 %v962, %v962
    %1049 = vrot.lane.b32.xlu0 %v1047, 32
    %v1050 = vpop.permute.xlu0 %1049
    %v1052 = vsel %vm86, %v1050, 0
    %1054 = vmatprep.subr.bf16.mxu0 0
    %1055 = vmatpush1.bf16.msra.mxu0 0
    %1056 = vmatprep.subr.bf16.mxu0 0
    %1057 = vmatpush1.bf16.msra.mxu0 0
    %1058 = vmatprep.subr.bf16.mxu0 0
    %1059 = vmatpush1.bf16.msra.mxu0 0
    %1060 = vmatprep.subr.bf16.mxu0 0
    %1061 = vmatpush1.bf16.msra.mxu0 0
    %1062 = vmatprep.subr.bf16.mxu0 0
    %1063 = vmatpush1.bf16.msra.mxu0 0
    %1064 = vmatprep.subr.bf16.mxu0 0
    %1065 = vmatpush1.bf16.msra.mxu0 0
    %1066 = vmatprep.subr.bf16.mxu0 0
    %1067 = vmatpush1.bf16.msra.mxu0 %v83
    %1068 = vmatprep.subr.bf16.mxu0 0
    %1069 = vmatpush1.bf16.msra.mxu0 %v82
    %1070 = vmatprep.subr.bf16.mxu0 0
    %1071 = vmatpush2.bf16.msra.mxu0 0
    %1072 = vmatprep.subr.bf16.mxu0 0
    %1073 = vmatpush2.bf16.msra.mxu0 0
    %1074 = vmatprep.subr.bf16.mxu0 0
    %1075 = vmatpush2.bf16.msra.mxu0 0
    %1076 = vmatprep.subr.bf16.mxu0 0
    %1077 = vmatpush2.bf16.msra.mxu0 0
    %1078 = vmatprep.subr.bf16.mxu0 0
    %1079 = vmatpush2.bf16.msra.mxu0 0
    %1080 = vmatprep.subr.bf16.mxu0 0
    %1081 = vmatpush2.bf16.msra.mxu0 0
    %1082 = vmatprep.subr.bf16.mxu0 0
    %1083 = vmatpush2.bf16.msra.mxu0 0
    %1084 = vmatprep.subr.bf16.mxu0 0
    %1085 = vmatpush2.bf16.msra.mxu0 0
    %1086 = vmatprep.mubr.bf16.mxu0 0
    %1087 = vmatmul.mubr.bf16.gmra.mxu0 %v1052
    %v1088 = vpop.f32.mrf.mxu0
    %v1089 = vadd.f32 0.0, %v1088
    %v1090 = vpop.f32.mrf.mxu0
    %v1091 = vpop.f32.mrf.mxu0
    %v1092 = vpop.f32.mrf.mxu0
    %1093 = vdwg.mxu0
    %v1094 = vadd.f32 %v1046, %v1089
    %v1095 = vxor.u32 %v1094, 2147483648
    %v1096 = vmul.f32 %v1095, 1.442695
    %v1097 = vpow.pop %v1096
    %v1098 = vadd.f32 %v1097, 1.0
    %v1099 = vrcp.pop %v1098
    %v1100 = vmul.f32 1.0, %v1099
    %v1101 = vtanh.pop %v1094
    %v1102 = vmul.f32 %v1100, %v956
    %1104 = vrot.lane.b32.xlu0 %v1101, 64
    %v1105 = vpop.permute.xlu0 %1104
    %v1107 = vmul.f32 %v1100, %v1105
    %1109 = vrot.lane.b32.xlu0 %v1107, 32
    %v1110 = vpop.permute.xlu0 %1109
    %v1112 = vadd.f32 %v1102, %v1110
    %v1113 = vtanh.pop %v1112
    %1115 = vrot.lane.b32.xlu0 %v1113, 64
    %v1116 = vpop.permute.xlu0 %1115
    %v1118 = vmul.f32 %v1100, %v1116
    %1120 = vrot.lane.b32.xlu0 %v1118, 32
    %v1121 = vpop.permute.xlu0 %1120
    %1123 = vrot.lane.b32.xlu0 %v1038, 64
    %v1124 = vpop.permute.xlu0 %1123
    %v1126 = vsel %vm86, %v1121, %v1124
    %v1127 = vpack.c.bf16 %v1126, %v1126
    %v1129 = vsel %vm191, %v1127, 0
    %1131 = vmatprep.subr.bf16.mxu0 0
    %1132 = vmatpush1.bf16.msra.mxu0 0
    %1133 = vmatprep.subr.bf16.mxu0 0
    %1134 = vmatpush1.bf16.msra.mxu0 0
    %1135 = vmatprep.subr.bf16.mxu0 0
    %1136 = vmatpush1.bf16.msra.mxu0 0
    %1137 = vmatprep.subr.bf16.mxu0 0
    %1138 = vmatpush1.bf16.msra.mxu0 0
    %1139 = vmatprep.subr.bf16.mxu0 0
    %1140 = vmatpush1.bf16.msra.mxu0 %v186
    %1141 = vmatprep.subr.bf16.mxu0 0
    %1142 = vmatpush1.bf16.msra.mxu0 %v185
    %1143 = vmatprep.subr.bf16.mxu0 0
    %1144 = vmatpush1.bf16.msra.mxu0 %v184
    %1145 = vmatprep.subr.bf16.mxu0 0
    %1146 = vmatpush1.bf16.msra.mxu0 %v183
    %1147 = vmatprep.subr.bf16.mxu0 0
    %1148 = vmatpush2.bf16.msra.mxu0 0
    %1149 = vmatprep.subr.bf16.mxu0 0
    %1150 = vmatpush2.bf16.msra.mxu0 0
    %1151 = vmatprep.subr.bf16.mxu0 0
    %1152 = vmatpush2.bf16.msra.mxu0 0
    %1153 = vmatprep.subr.bf16.mxu0 0
    %1154 = vmatpush2.bf16.msra.mxu0 0
    %1155 = vmatprep.subr.bf16.mxu0 0
    %1156 = vmatpush2.bf16.msra.mxu0 0
    %1157 = vmatprep.subr.bf16.mxu0 0
    %1158 = vmatpush2.bf16.msra.mxu0 0
    %1159 = vmatprep.subr.bf16.mxu0 0
    %1160 = vmatpush2.bf16.msra.mxu0 0
    %1161 = vmatprep.subr.bf16.mxu0 0
    %1162 = vmatpush2.bf16.msra.mxu0 0
    %1163 = vmatprep.mubr.bf16.mxu0 0
    %1164 = vmatmul.mubr.bf16.gmra.mxu0 %v1129
    %v1165 = vpop.f32.mrf.mxu0
    %v1166 = vadd.f32 %v165, %v1165
    %v1167 = vpop.f32.mrf.mxu0
    %v1168 = vpop.f32.mrf.mxu0
    %v1169 = vpop.f32.mrf.mxu0
    %1170 = vdwg.mxu0
    %v1171 = vxor.u32 %v1166, 2147483648
    %v1172 = vmul.f32 %v1171, 1.442695
    %v1173 = vpow.pop %v1172
    %v1174 = vadd.f32 %v1173, 1.0
    %v1175 = vrcp.pop %v1174
    %v1176 = vmul.f32 1.0, %v1175
    %v1177 = vtanh.pop %v1166
    %v1178 = vmul.f32 %v1176, %v1032
    %1180 = vrot.lane.b32.xlu0 %v1177, 64
    %v1181 = vpop.permute.xlu0 %1180
    %v1183 = vmul.f32 %v1176, %v1181
    %1185 = vrot.lane.b32.xlu0 %v1183, 32
    %v1186 = vpop.permute.xlu0 %1185
    %v1188 = vadd.f32 %v1178, %v1186
    %v1189 = vtanh.pop %v1188
    %1191 = vrot.lane.b32.xlu0 %v1189, 64
    %v1192 = vpop.permute.xlu0 %1191
    %v1194 = vmul.f32 %v1176, %v1192
    %1196 = vrot.lane.b32.xlu0 %v1194, 32
    %v1197 = vpop.permute.xlu0 %1196
    %s1199 = scalar_lea.vmem [#allocation8], 12
    %1200 = vst.msk [vmem:[%s1199] sm:$0x3] %vm263, %v1197
    %s1201 = scalar_lea.vmem [#allocation2], 14
    %v1202 = vld [vmem:[%s1201] sm:$0x3]
    %v1203 = vpack.c.bf16 %v1118, %v1118
    %1205 = vrot.lane.b32.xlu0 %v1203, 32
    %v1206 = vpop.permute.xlu0 %1205
    %v1208 = vsel %vm86, %v1206, 0
    %1210 = vmatprep.subr.bf16.mxu0 0
    %1211 = vmatpush1.bf16.msra.mxu0 0
    %1212 = vmatprep.subr.bf16.mxu0 0
    %1213 = vmatpush1.bf16.msra.mxu0 0
    %1214 = vmatprep.subr.bf16.mxu0 0
    %1215 = vmatpush1.bf16.msra.mxu0 0
    %1216 = vmatprep.subr.bf16.mxu0 0
    %1217 = vmatpush1.bf16.msra.mxu0 0
    %1218 = vmatprep.subr.bf16.mxu0 0
    %1219 = vmatpush1.bf16.msra.mxu0 0
    %1220 = vmatprep.subr.bf16.mxu0 0
    %1221 = vmatpush1.bf16.msra.mxu0 0
    %1222 = vmatprep.subr.bf16.mxu0 0
    %1223 = vmatpush1.bf16.msra.mxu0 %v83
    %1224 = vmatprep.subr.bf16.mxu0 0
    %1225 = vmatpush1.bf16.msra.mxu0 %v82
    %1226 = vmatprep.subr.bf16.mxu0 0
    %1227 = vmatpush2.bf16.msra.mxu0 0
    %1228 = vmatprep.subr.bf16.mxu0 0
    %1229 = vmatpush2.bf16.msra.mxu0 0
    %1230 = vmatprep.subr.bf16.mxu0 0
    %1231 = vmatpush2.bf16.msra.mxu0 0
    %1232 = vmatprep.subr.bf16.mxu0 0
    %1233 = vmatpush2.bf16.msra.mxu0 0
    %1234 = vmatprep.subr.bf16.mxu0 0
    %1235 = vmatpush2.bf16.msra.mxu0 0
    %1236 = vmatprep.subr.bf16.mxu0 0
    %1237 = vmatpush2.bf16.msra.mxu0 0
    %1238 = vmatprep.subr.bf16.mxu0 0
    %1239 = vmatpush2.bf16.msra.mxu0 0
    %1240 = vmatprep.subr.bf16.mxu0 0
    %1241 = vmatpush2.bf16.msra.mxu0 0
    %1242 = vmatprep.mubr.bf16.mxu0 0
    %1243 = vmatmul.mubr.bf16.gmra.mxu0 %v1208
    %v1244 = vpop.f32.mrf.mxu0
    %v1245 = vadd.f32 0.0, %v1244
    %v1246 = vpop.f32.mrf.mxu0
    %v1247 = vpop.f32.mrf.mxu0
    %v1248 = vpop.f32.mrf.mxu0
    %1249 = vdwg.mxu0
    %v1250 = vadd.f32 %v1202, %v1245
    %v1251 = vxor.u32 %v1250, 2147483648
    %v1252 = vmul.f32 %v1251, 1.442695
    %v1253 = vpow.pop %v1252
    %v1254 = vadd.f32 %v1253, 1.0
    %v1255 = vrcp.pop %v1254
    %v1256 = vmul.f32 1.0, %v1255
    %v1257 = vtanh.pop %v1250
    %v1258 = vmul.f32 %v1256, %v1112
    %1260 = vrot.lane.b32.xlu0 %v1257, 64
    %v1261 = vpop.permute.xlu0 %1260
    %v1263 = vmul.f32 %v1256, %v1261
    %1265 = vrot.lane.b32.xlu0 %v1263, 32
    %v1266 = vpop.permute.xlu0 %1265
    %v1268 = vadd.f32 %v1258, %v1266
    %v1269 = vtanh.pop %v1268
    %1271 = vrot.lane.b32.xlu0 %v1269, 64
    %v1272 = vpop.permute.xlu0 %1271
    %v1274 = vmul.f32 %v1256, %v1272
    %1276 = vrot.lane.b32.xlu0 %v1274, 32
    %v1277 = vpop.permute.xlu0 %1276
    %1279 = vrot.lane.b32.xlu0 %v1194, 64
    %v1280 = vpop.permute.xlu0 %1279
    %v1282 = vsel %vm86, %v1277, %v1280
    %v1283 = vpack.c.bf16 %v1282, %v1282
    %v1285 = vsel %vm191, %v1283, 0
    %1287 = vmatprep.subr.bf16.mxu0 0
    %1288 = vmatpush1.bf16.msra.mxu0 0
    %1289 = vmatprep.subr.bf16.mxu0 0
    %1290 = vmatpush1.bf16.msra.mxu0 0
    %1291 = vmatprep.subr.bf16.mxu0 0
    %1292 = vmatpush1.bf16.msra.mxu0 0
    %1293 = vmatprep.subr.bf16.mxu0 0
    %1294 = vmatpush1.bf16.msra.mxu0 0
    %1295 = vmatprep.subr.bf16.mxu0 0
    %1296 = vmatpush1.bf16.msra.mxu0 %v186
    %1297 = vmatprep.subr.bf16.mxu0 0
    %1298 = vmatpush1.bf16.msra.mxu0 %v185
    %1299 = vmatprep.subr.bf16.mxu0 0
    %1300 = vmatpush1.bf16.msra.mxu0 %v184
    %1301 = vmatprep.subr.bf16.mxu0 0
    %1302 = vmatpush1.bf16.msra.mxu0 %v183
    %1303 = vmatprep.subr.bf16.mxu0 0
    %1304 = vmatpush2.bf16.msra.mxu0 0
    %1305 = vmatprep.subr.bf16.mxu0 0
    %1306 = vmatpush2.bf16.msra.mxu0 0
    %1307 = vmatprep.subr.bf16.mxu0 0
    %1308 = vmatpush2.bf16.msra.mxu0 0
    %1309 = vmatprep.subr.bf16.mxu0 0
    %1310 = vmatpush2.bf16.msra.mxu0 0
    %1311 = vmatprep.subr.bf16.mxu0 0
    %1312 = vmatpush2.bf16.msra.mxu0 0
    %1313 = vmatprep.subr.bf16.mxu0 0
    %1314 = vmatpush2.bf16.msra.mxu0 0
    %1315 = vmatprep.subr.bf16.mxu0 0
    %1316 = vmatpush2.bf16.msra.mxu0 0
    %1317 = vmatprep.subr.bf16.mxu0 0
    %1318 = vmatpush2.bf16.msra.mxu0 0
    %1319 = vmatprep.mubr.bf16.mxu0 0
    %1320 = vmatmul.mubr.bf16.gmra.mxu0 %v1285
    %v1321 = vpop.f32.mrf.mxu0
    %v1322 = vadd.f32 %v165, %v1321
    %v1323 = vpop.f32.mrf.mxu0
    %v1324 = vpop.f32.mrf.mxu0
    %v1325 = vpop.f32.mrf.mxu0
    %1326 = vdwg.mxu0
    %v1327 = vxor.u32 %v1322, 2147483648
    %v1328 = vmul.f32 %v1327, 1.442695
    %v1329 = vpow.pop %v1328
    %v1330 = vadd.f32 %v1329, 1.0
    %v1331 = vrcp.pop %v1330
    %v1332 = vmul.f32 1.0, %v1331
    %v1333 = vtanh.pop %v1322
    %v1334 = vmul.f32 %v1332, %v1188
    %1336 = vrot.lane.b32.xlu0 %v1333, 64
    %v1337 = vpop.permute.xlu0 %1336
    %v1339 = vmul.f32 %v1332, %v1337
    %1341 = vrot.lane.b32.xlu0 %v1339, 32
    %v1342 = vpop.permute.xlu0 %1341
    %v1344 = vadd.f32 %v1334, %v1342
    %v1345 = vtanh.pop %v1344
    %1347 = vrot.lane.b32.xlu0 %v1345, 64
    %v1348 = vpop.permute.xlu0 %1347
    %v1350 = vmul.f32 %v1332, %v1348
    %1352 = vrot.lane.b32.xlu0 %v1350, 32
    %v1353 = vpop.permute.xlu0 %1352
    %s1355 = scalar_lea.vmem [#allocation8], 14
    %1356 = vst.msk [vmem:[%s1355] sm:$0x3] %vm263, %v1353
    %s1357 = scalar_lea.vmem [#allocation2], 16
    %v1358 = vld [vmem:[%s1357] sm:$0x3]
    %v1359 = vpack.c.bf16 %v1274, %v1274
    %1361 = vrot.lane.b32.xlu0 %v1359, 32
    %v1362 = vpop.permute.xlu0 %1361
    %v1364 = vsel %vm86, %v1362, 0
    %1366 = vmatprep.subr.bf16.mxu0 0
    %1367 = vmatpush1.bf16.msra.mxu0 0
    %1368 = vmatprep.subr.bf16.mxu0 0
    %1369 = vmatpush1.bf16.msra.mxu0 0
    %1370 = vmatprep.subr.bf16.mxu0 0
    %1371 = vmatpush1.bf16.msra.mxu0 0
    %1372 = vmatprep.subr.bf16.mxu0 0
    %1373 = vmatpush1.bf16.msra.mxu0 0
    %1374 = vmatprep.subr.bf16.mxu0 0
    %1375 = vmatpush1.bf16.msra.mxu0 0
    %1376 = vmatprep.subr.bf16.mxu0 0
    %1377 = vmatpush1.bf16.msra.mxu0 0
    %1378 = vmatprep.subr.bf16.mxu0 0
    %1379 = vmatpush1.bf16.msra.mxu0 %v83
    %1380 = vmatprep.subr.bf16.mxu0 0
    %1381 = vmatpush1.bf16.msra.mxu0 %v82
    %1382 = vmatprep.subr.bf16.mxu0 0
    %1383 = vmatpush2.bf16.msra.mxu0 0
    %1384 = vmatprep.subr.bf16.mxu0 0
    %1385 = vmatpush2.bf16.msra.mxu0 0
    %1386 = vmatprep.subr.bf16.mxu0 0
    %1387 = vmatpush2.bf16.msra.mxu0 0
    %1388 = vmatprep.subr.bf16.mxu0 0
    %1389 = vmatpush2.bf16.msra.mxu0 0
    %1390 = vmatprep.subr.bf16.mxu0 0
    %1391 = vmatpush2.bf16.msra.mxu0 0
    %1392 = vmatprep.subr.bf16.mxu0 0
    %1393 = vmatpush2.bf16.msra.mxu0 0
    %1394 = vmatprep.subr.bf16.mxu0 0
    %1395 = vmatpush2.bf16.msra.mxu0 0
    %1396 = vmatprep.subr.bf16.mxu0 0
    %1397 = vmatpush2.bf16.msra.mxu0 0
    %1398 = vmatprep.mubr.bf16.mxu0 0
    %1399 = vmatmul.mubr.bf16.gmra.mxu0 %v1364
    %v1400 = vpop.f32.mrf.mxu0
    %v1401 = vadd.f32 0.0, %v1400
    %v1402 = vpop.f32.mrf.mxu0
    %v1403 = vpop.f32.mrf.mxu0
    %v1404 = vpop.f32.mrf.mxu0
    %1405 = vdwg.mxu0
    %v1406 = vadd.f32 %v1358, %v1401
    %v1407 = vxor.u32 %v1406, 2147483648
    %v1408 = vmul.f32 %v1407, 1.442695
    %v1409 = vpow.pop %v1408
    %v1410 = vadd.f32 %v1409, 1.0
    %v1411 = vrcp.pop %v1410
    %v1412 = vmul.f32 1.0, %v1411
    %v1413 = vtanh.pop %v1406
    %v1414 = vmul.f32 %v1412, %v1268
    %1416 = vrot.lane.b32.xlu0 %v1413, 64
    %v1417 = vpop.permute.xlu0 %1416
    %v1419 = vmul.f32 %v1412, %v1417
    %1421 = vrot.lane.b32.xlu0 %v1419, 32
    %v1422 = vpop.permute.xlu0 %1421
    %v1424 = vadd.f32 %v1414, %v1422
    %v1425 = vtanh.pop %v1424
    %1427 = vrot.lane.b32.xlu0 %v1425, 64
    %v1428 = vpop.permute.xlu0 %1427
    %v1430 = vmul.f32 %v1412, %v1428
    %1432 = vrot.lane.b32.xlu0 %v1430, 32
    %v1433 = vpop.permute.xlu0 %1432
    %1435 = vrot.lane.b32.xlu0 %v1350, 64
    %v1436 = vpop.permute.xlu0 %1435
    %v1438 = vsel %vm86, %v1433, %v1436
    %v1439 = vpack.c.bf16 %v1438, %v1438
    %v1441 = vsel %vm191, %v1439, 0
    %1443 = vmatprep.subr.bf16.mxu0 0
    %1444 = vmatpush1.bf16.msra.mxu0 0
    %1445 = vmatprep.subr.bf16.mxu0 0
    %1446 = vmatpush1.bf16.msra.mxu0 0
    %1447 = vmatprep.subr.bf16.mxu0 0
    %1448 = vmatpush1.bf16.msra.mxu0 0
    %1449 = vmatprep.subr.bf16.mxu0 0
    %1450 = vmatpush1.bf16.msra.mxu0 0
    %1451 = vmatprep.subr.bf16.mxu0 0
    %1452 = vmatpush1.bf16.msra.mxu0 %v186
    %1453 = vmatprep.subr.bf16.mxu0 0
    %1454 = vmatpush1.bf16.msra.mxu0 %v185
    %1455 = vmatprep.subr.bf16.mxu0 0
    %1456 = vmatpush1.bf16.msra.mxu0 %v184
    %1457 = vmatprep.subr.bf16.mxu0 0
    %1458 = vmatpush1.bf16.msra.mxu0 %v183
    %1459 = vmatprep.subr.bf16.mxu0 0
    %1460 = vmatpush2.bf16.msra.mxu0 0
    %1461 = vmatprep.subr.bf16.mxu0 0
    %1462 = vmatpush2.bf16.msra.mxu0 0
    %1463 = vmatprep.subr.bf16.mxu0 0
    %1464 = vmatpush2.bf16.msra.mxu0 0
    %1465 = vmatprep.subr.bf16.mxu0 0
    %1466 = vmatpush2.bf16.msra.mxu0 0
    %1467 = vmatprep.subr.bf16.mxu0 0
    %1468 = vmatpush2.bf16.msra.mxu0 0
    %1469 = vmatprep.subr.bf16.mxu0 0
    %1470 = vmatpush2.bf16.msra.mxu0 0
    %1471 = vmatprep.subr.bf16.mxu0 0
    %1472 = vmatpush2.bf16.msra.mxu0 0
    %1473 = vmatprep.subr.bf16.mxu0 0
    %1474 = vmatpush2.bf16.msra.mxu0 0
    %1475 = vmatprep.mubr.bf16.mxu0 0
    %1476 = vmatmul.mubr.bf16.gmra.mxu0 %v1441
    %v1477 = vpop.f32.mrf.mxu0
    %v1478 = vadd.f32 %v165, %v1477
    %v1479 = vpop.f32.mrf.mxu0
    %v1480 = vpop.f32.mrf.mxu0
    %v1481 = vpop.f32.mrf.mxu0
    %1482 = vdwg.mxu0
    %v1483 = vxor.u32 %v1478, 2147483648
    %v1484 = vmul.f32 %v1483, 1.442695
    %v1485 = vpow.pop %v1484
    %v1486 = vadd.f32 %v1485, 1.0
    %v1487 = vrcp.pop %v1486
    %v1488 = vmul.f32 1.0, %v1487
    %v1489 = vtanh.pop %v1478
    %v1490 = vmul.f32 %v1488, %v1344
    %1492 = vrot.lane.b32.xlu0 %v1489, 64
    %v1493 = vpop.permute.xlu0 %1492
    %v1495 = vmul.f32 %v1488, %v1493
    %1497 = vrot.lane.b32.xlu0 %v1495, 32
    %v1498 = vpop.permute.xlu0 %1497
    %v1500 = vadd.f32 %v1490, %v1498
    %v1501 = vtanh.pop %v1500
    %1503 = vrot.lane.b32.xlu0 %v1501, 64
    %v1504 = vpop.permute.xlu0 %1503
    %v1506 = vmul.f32 %v1488, %v1504
    %1508 = vrot.lane.b32.xlu0 %v1506, 32
    %v1509 = vpop.permute.xlu0 %1508
    %s1511 = scalar_lea.vmem [#allocation8], 16
    %1512 = vst.msk [vmem:[%s1511] sm:$0x3] %vm263, %v1509
    // Predicated region
    $region30: #{tpu_custom_call.1} parent=1 // pred_check
      _
    $region31: #{tpu_custom_call.1} parent=1 // pred_check_branch
      %1514 = sbr.rel (0) target = $region33
    $region32: #{tpu_custom_call.1} parent=1 // pred_region
      %s1516 = ssub.s32 288, 288
      %1517 = vsyncadd [#allocation4], %s1516
      %s1518 = sshll.u32 [#allocation8], 4
      %s1519 = int_to_ptr.vmem [resolvable:$true] %s1518
      %1524 = dma.vmem_to_hbm [thread:$0]  %s1519, 288, %s4, [#allocation4], 32, 32, 2
    $region33: #{tpu_custom_call.1} parent=1 // pred_fallthru
      _
    // Predicated region
    $region34: #{tpu_custom_call.1} parent=1 // pred_check
      _
    $region35: #{tpu_custom_call.1} parent=1 // pred_check_branch
      %1526 = sbr.rel (0) target = $region37
    $region36: #{tpu_custom_call.1} parent=1 // pred_region
      %1527 = dma.done [#allocation4], 288
    $region37: #{tpu_custom_call.1} parent=1 // pred_fallthru
      _
    %1528 = vsyncpa [#allocation3], 1
    %1529 = vsyncpa [#allocation6], 1
    %1530 = vsyncpa [#allocation4], 1

</llo_original>
